<compile_context>
chip_gen: v6e
topology: v6e:2x2x1
jax: 0.10.0
libtpu: 0.0.40
codegen_flags: <defaults>
</compile_context>

<pallas_src>
import jax
import jax.numpy as jnp
from jax.experimental import pallas as pl
from jax.experimental.pallas import tpu as pltpu

LANE = 128  # lane width used for channel padding and the padded output slab


def _round_up(n, m):
    return ((n + m - 1) // m) * m


def deepplant_kernel(x_ref, wconv_ref, wproj_ref, wqkv_ref, wo_ref,
                     w1_ref, w2_ref, wfc_ref, bias_ref, out_ref):
    f32, bf16 = jnp.float32, jnp.bfloat16
    BT, L, C_in = x_ref.shape
    NCp = wconv_ref.shape[2]          # padded backbone num_channels
    Ep = wproj_ref.shape[1]           # padded embed_dim
    Fp = w1_ref.shape[1]              # padded FFN hidden

    # --- packed biases (one row each, zero-padded to 3*Ep lanes, f32) ---------
    bconv = bias_ref[0:1, :NCp]
    bproj = bias_ref[1:2, :Ep]
    bqkv = bias_ref[2:3, :]                                    # (1, 3*Ep)
    bo = bias_ref[3:4, :Ep]
    b1 = bias_ref[4:5, :Fp]
    b2 = bias_ref[5:6, :Ep]
    bfc = bias_ref[6:7, :out_ref.shape[-1]]                    # (1, LANE)

    # --- backbone: Conv1d(k=3, pad=1) via roll-based shifted matmuls + ReLU ---
    x2 = x_ref[...].reshape(BT * L, C_in)                      # f32 (tokens, C_in)
    lpos = jax.lax.broadcasted_iota(jnp.int32, (BT * L, 1), 0) % L
    # x_prev[l] = x[l-1] (zero at l==0), x_next[l] = x[l+1] (zero at l==L-1).
    # Rolling the flattened (BT*L) axis is safe: cross-batch wraps land exactly
    # on the rows that the boundary mask zeroes anyway.
    x_prev = jnp.where(lpos == 0, 0.0, pltpu.roll(x2, shift=1, axis=0))
    x_next = jnp.where(lpos == L - 1, 0.0, pltpu.roll(x2, shift=BT * L - 1, axis=0))

    h = (jnp.dot(x_prev.astype(bf16), wconv_ref[0], preferred_element_type=f32)
         + jnp.dot(x2.astype(bf16), wconv_ref[1], preferred_element_type=f32)
         + jnp.dot(x_next.astype(bf16), wconv_ref[2], preferred_element_type=f32)
         + bconv)
    h = jnp.maximum(h, 0.0)                                    # (tokens, NCp)

    # --- input_proj: Conv1d(k=1) == matmul ------------------------------------
    src = jnp.dot(h.astype(bf16), wproj_ref[...], preferred_element_type=f32) + bproj
    # permute(0, 2, 1): layout no-op, src is already (tokens, embed_dim)

    # --- transformer block: fused-QKV self-attention + FFN (residuals) --------
    # 1/sqrt(E) is pre-folded into the Q slice of wqkv/bqkv at trace time.
    qkv = jnp.dot(src.astype(bf16), wqkv_ref[...], preferred_element_type=f32) + bqkv
    q = qkv[:, 0:Ep].reshape(BT, L, Ep)
    k = qkv[:, Ep:2 * Ep].reshape(BT, L, Ep)
    v = qkv[:, 2 * Ep:3 * Ep].reshape(BT, L, Ep)

    scores = jnp.einsum("bqd,bkd->bqk", q.astype(bf16), k.astype(bf16),
                        preferred_element_type=f32)            # (BT, L, L)
    scores = scores - jnp.max(scores, axis=-1, keepdims=True)
    p = jnp.exp(scores)
    attn = p * pl.reciprocal(jnp.sum(p, axis=-1, keepdims=True), approx=False)
    ctx = jnp.einsum("bqk,bkd->bqd", attn.astype(bf16), v.astype(bf16),
                     preferred_element_type=f32).reshape(BT * L, Ep)

    h1 = src + jnp.dot(ctx.astype(bf16), wo_ref[...], preferred_element_type=f32) + bo
    ffn = jnp.maximum(
        jnp.dot(h1.astype(bf16), w1_ref[...], preferred_element_type=f32) + b1, 0.0)
    h2 = h1 + jnp.dot(ffn.astype(bf16), w2_ref[...], preferred_element_type=f32) + b2

    # --- transpose(1, 2): layout no-op.  prediction head: pool + Linear -------
    # 1/L (mean pool) is pre-folded into wfc, so pooling is a plain sum.
    pooled = jnp.sum(h2.reshape(BT, L, Ep), axis=1)            # (BT, Ep) f32
    out_ref[...] = (jnp.dot(pooled.astype(bf16), wfc_ref[...],
                            preferred_element_type=f32) + bfc)  # lane-dense (BT, LANE)


def deepplant_forward(x, params, *, batch_tile=None):
    """x: (B, C_in, L) NCL like PyTorch Conv1d input."""
    f32, bf16 = jnp.float32, jnp.bfloat16
    B, C_in, L = x.shape
    x_cl = jnp.transpose(x, (0, 2, 1)).astype(f32)             # (B, L, C_in)

    if batch_tile is None:
        # >= 2 grid steps when possible (v7x has 2 TensorCores; also lets the
        # x-tile DMA pipeline against compute on all generations).
        batch_tile = B // 2 if (B >= 2 and B % 2 == 0) else B
    BT = batch_tile
    assert B % BT == 0, "batch_tile must divide B"
    G = B // BT

    NC = params["wconv"].shape[2]
    E = params["wq"].shape[0]
    F = params["w1"].shape[1]
    num_classes = params["wfc"].shape[1]
    assert num_classes <= LANE

    # Lane-padded channel widths (trace-time zero padding -> lane-dense kernel).
    NCp = _round_up(NC, LANE)
    Ep = _round_up(E, LANE)
    Fp = _round_up(F, LANE)
    W_SLAB = 3 * Ep

    inv_s = jnp.float32(1.0) / jnp.sqrt(jnp.float32(E))

    def pad2(a, rows, cols):
        return jnp.pad(a, ((0, rows - a.shape[0]), (0, cols - a.shape[1])))

    # Fused / packed weights (trace-time XLA ops, tiny).  bf16 for the MXU.
    wconv = jnp.pad(params["wconv"], ((0, 0), (0, 0), (0, NCp - NC))).astype(bf16)
    wproj = pad2(params["wproj"], NCp, Ep).astype(bf16)
    wqkv = jnp.concatenate([pad2(params["wq"] * inv_s, Ep, Ep),
                            pad2(params["wk"], Ep, Ep),
                            pad2(params["wv"], Ep, Ep)], axis=1).astype(bf16)
    wo = pad2(params["wo"], Ep, Ep).astype(bf16)
    w1 = pad2(params["w1"], Ep, Fp).astype(bf16)
    w2 = pad2(params["w2"], Fp, Ep).astype(bf16)
    wfc = pad2(params["wfc"] * (1.0 / L), Ep, LANE).astype(bf16)   # 1/L folded

    def row(v):
        return jnp.pad(v, ((0, 0), (0, W_SLAB - v.shape[1])))

    bqkv_row = jnp.concatenate([
        jnp.pad(params["bq"] * inv_s, ((0, 0), (0, Ep - E))),
        jnp.pad(params["bk"], ((0, 0), (0, Ep - E))),
        jnp.pad(params["bv"], ((0, 0), (0, Ep - E)))], axis=1)     # (1, 3*Ep)

    bias_slab = jnp.concatenate([
        row(params["bconv"]),
        row(params["bproj"]),
        bqkv_row,
        row(params["bo"]),
        row(params["b1"]),
        row(params["b2"]),
        row(params["bfc"]),
        jnp.zeros((1, W_SLAB), f32),
    ], axis=0).astype(f32)                                         # (8, 3*Ep)

    weights = [wconv, wproj, wqkv, wo, w1, w2, wfc, bias_slab]

    def full_spec(a):
        rank = a.ndim
        return pl.BlockSpec(a.shape, lambda b, _r=rank: (0,) * _r)

    in_specs = [pl.BlockSpec((BT, L, C_in), lambda b: (b, 0, 0))]
    in_specs += [full_spec(w) for w in weights]

    out_pad = pl.pallas_call(
        deepplant_kernel,
        out_shape=jax.ShapeDtypeStruct((G, BT, LANE), f32),
        grid_spec=pltpu.PrefetchScalarGridSpec(
            num_scalar_prefetch=0,
            grid=(G,),
            in_specs=in_specs,
            # Leading grid dim squeezed; (BT, LANE) block equals the full
            # trailing dims of the output array -> unmasked lane-dense stores.
            out_specs=pl.BlockSpec((None, BT, LANE), lambda b: (b, 0, 0)),
        ),
        compiler_params=pltpu.CompilerParams(
            dimension_semantics=("parallel",),
            vmem_limit_bytes=32 * 1024 * 1024),
    )(x_cl, *weights)

    return out_pad.reshape(B, LANE)[:, :num_classes]


def reference_forward(x, p):
    """Pure-jnp reference mirroring the kernel's numeric recipe
    (bf16 MXU operands, f32 accumulation, 1/sqrt(E) and 1/L folds)."""
    f32, bf16 = jnp.float32, jnp.bfloat16

    def mm(a, w):
        return jnp.einsum("...k,kn->...n", a.astype(bf16), w.astype(bf16),
                          preferred_element_type=f32)

    x_cl = jnp.transpose(x, (0, 2, 1))
    L = x_cl.shape[1]
    E = p["wq"].shape[0]
    inv_s = jnp.float32(1.0) / jnp.sqrt(jnp.float32(E))

    xp = jnp.pad(x_cl, ((0, 0), (1, 1), (0, 0)))
    h = (mm(xp[:, 0:L], p["wconv"][0]) + mm(xp[:, 1:L + 1], p["wconv"][1])
         + mm(xp[:, 2:L + 2], p["wconv"][2]) + p["bconv"])
    h = jnp.maximum(h, 0.0)
    src = mm(h, p["wproj"]) + p["bproj"]

    q = mm(src, p["wq"] * inv_s) + p["bq"] * inv_s
    k = mm(src, p["wk"]) + p["bk"]
    v = mm(src, p["wv"]) + p["bv"]
    scores = jnp.einsum("bld,bmd->blm", q.astype(bf16), k.astype(bf16),
                        preferred_element_type=f32)
    attn = jax.nn.softmax(scores, axis=-1)
    ctx = jnp.einsum("blm,bmd->bld", attn.astype(bf16), v.astype(bf16),
                     preferred_element_type=f32)
    h1 = src + mm(ctx, p["wo"]) + p["bo"]
    ffn = jnp.maximum(mm(h1, p["w1"]) + p["b1"], 0.0)
    h2 = h1 + mm(ffn, p["w2"]) + p["b2"]

    pooled = jnp.sum(h2, axis=1)
    return mm(pooled, p["wfc"] * (1.0 / L)) + p["bfc"]


def init_params(key, c_in, num_channels, embed_dim, ffn_hidden, num_classes):
    ks = jax.random.split(key, 18)
    n = lambda k, shape, s=0.05: (jax.random.normal(k, shape, jnp.float32) * s)
    return {
        "wconv": n(ks[0], (3, c_in, num_channels)),
        "bconv": n(ks[1], (1, num_channels), 0.02),
        "wproj": n(ks[2], (num_channels, embed_dim)),
        "bproj": n(ks[3], (1, embed_dim), 0.02),
        "wq": n(ks[4], (embed_dim, embed_dim)),
        "bq": n(ks[5], (1, embed_dim), 0.02),
        "wk": n(ks[6], (embed_dim, embed_dim)),
        "bk": n(ks[7], (1, embed_dim), 0.02),
        "wv": n(ks[8], (embed_dim, embed_dim)),
        "bv": n(ks[9], (1, embed_dim), 0.02),
        "wo": n(ks[10], (embed_dim, embed_dim)),
        "bo": n(ks[11], (1, embed_dim), 0.02),
        "w1": n(ks[12], (embed_dim, ffn_hidden)),
        "b1": n(ks[13], (1, ffn_hidden), 0.02),
        "w2": n(ks[14], (ffn_hidden, embed_dim)),
        "b2": n(ks[15], (1, embed_dim), 0.02),
        "wfc": n(ks[16], (embed_dim, num_classes)),
        "bfc": n(ks[17], (1, num_classes), 0.02),
    }


if __name__ == "__main__":
    B, C_IN, L = 2, 4, 16
    NUM_CHANNELS, EMBED_DIM, FFN_HIDDEN, NUM_CLASSES = 32, 32, 64, 8

    key = jax.random.PRNGKey(0)
    kx, kp = jax.random.split(key)
    x = jax.random.normal(kx, (B, C_IN, L), jnp.float32)       # NCL, like PyTorch
    params = init_params(kp, C_IN, NUM_CHANNELS, EMBED_DIM, FFN_HIDDEN, NUM_CLASSES)

    out = deepplant_forward(x, params)
    out = jax.block_until_ready(out)

    ref = reference_forward(x, params)
    assert out.shape == (B, NUM_CLASSES)
    assert jnp.allclose(out, ref, rtol=1e-2, atol=1e-3), (out, ref)

    # TODO(synk): the `bit` argument only toggles .detach() on backbone conv
    # weights (a gradient-flow concern); it has no effect on forward values.
    print("KERNEL_OK")
</pallas_src>

<mosaic_0001>
module attributes {stable_mosaic.version = 11 : i64} {
  func.func @deepplant_kernel(%arg0: i32, %arg1: memref<1x16x4xf32, #tpu.memory_space<vmem>>, %arg2: memref<3x4x128xbf16, #tpu.memory_space<vmem>>, %arg3: memref<128x128xbf16, #tpu.memory_space<vmem>>, %arg4: memref<128x384xbf16, #tpu.memory_space<vmem>>, %arg5: memref<128x128xbf16, #tpu.memory_space<vmem>>, %arg6: memref<128x128xbf16, #tpu.memory_space<vmem>>, %arg7: memref<128x128xbf16, #tpu.memory_space<vmem>>, %arg8: memref<128x128xbf16, #tpu.memory_space<vmem>>, %arg9: memref<8x384xf32, #tpu.memory_space<vmem>>, %arg10: memref<1x1x128xf32, #tpu.memory_space<vmem>>) attributes {dimension_semantics = [#tpu.dimension_semantics<parallel>], iteration_bounds = array<i64: 2>, scalar_prefetch = 0 : i64, scratch_operands = 0 : i64, tpu.core_type = #tpu.core_type<tc>, window_params = [{transform_indices = @transform_0, window_bounds = array<i64: 1, 16, 4>}, {pipeline_mode = #tpu.pipeline_mode<synchronous>, transform_indices = @transform_1, window_bounds = array<i64: 3, 4, 128>}, {pipeline_mode = #tpu.pipeline_mode<synchronous>, transform_indices = @transform_2, window_bounds = array<i64: 128, 128>}, {pipeline_mode = #tpu.pipeline_mode<synchronous>, transform_indices = @transform_3, window_bounds = array<i64: 128, 384>}, {pipeline_mode = #tpu.pipeline_mode<synchronous>, transform_indices = @transform_4, window_bounds = array<i64: 128, 128>}, {pipeline_mode = #tpu.pipeline_mode<synchronous>, transform_indices = @transform_5, window_bounds = array<i64: 128, 128>}, {pipeline_mode = #tpu.pipeline_mode<synchronous>, transform_indices = @transform_6, window_bounds = array<i64: 128, 128>}, {pipeline_mode = #tpu.pipeline_mode<synchronous>, transform_indices = @transform_7, window_bounds = array<i64: 128, 128>}, {pipeline_mode = #tpu.pipeline_mode<synchronous>, transform_indices = @transform_8, window_bounds = array<i64: 8, 384>}, {transform_indices = @transform_9, window_bounds = array<i64: 1, 1, 128>}]} {
    %c0 = arith.constant 0 : index
    %c0_0 = arith.constant 0 : index
    %0 = vector.load %arg9[%c0, %c0_0] : memref<8x384xf32, #tpu.memory_space<vmem>>, vector<1x128xf32>
    %c1 = arith.constant 1 : index
    %c0_1 = arith.constant 0 : index
    %1 = vector.load %arg9[%c1, %c0_1] : memref<8x384xf32, #tpu.memory_space<vmem>>, vector<1x128xf32>
    %c2 = arith.constant 2 : index
    %c0_2 = arith.constant 0 : index
    %2 = vector.load %arg9[%c2, %c0_2] : memref<8x384xf32, #tpu.memory_space<vmem>>, vector<1x384xf32>
    %c3 = arith.constant 3 : index
    %c0_3 = arith.constant 0 : index
    %3 = vector.load %arg9[%c3, %c0_3] : memref<8x384xf32, #tpu.memory_space<vmem>>, vector<1x128xf32>
    %c4 = arith.constant 4 : index
    %c0_4 = arith.constant 0 : index
    %4 = vector.load %arg9[%c4, %c0_4] : memref<8x384xf32, #tpu.memory_space<vmem>>, vector<1x128xf32>
    %c5 = arith.constant 5 : index
    %c0_5 = arith.constant 0 : index
    %5 = vector.load %arg9[%c5, %c0_5] : memref<8x384xf32, #tpu.memory_space<vmem>>, vector<1x128xf32>
    %c6 = arith.constant 6 : index
    %c0_6 = arith.constant 0 : index
    %6 = vector.load %arg9[%c6, %c0_6] : memref<8x384xf32, #tpu.memory_space<vmem>>, vector<1x128xf32>
    %c0_7 = arith.constant 0 : index
    %c0_8 = arith.constant 0 : index
    %c0_9 = arith.constant 0 : index
    %7 = vector.load %arg1[%c0_7, %c0_8, %c0_9] : memref<1x16x4xf32, #tpu.memory_space<vmem>>, vector<1x16x4xf32>
    %8 = vector.shape_cast %7 : vector<1x16x4xf32> to vector<16x4xf32>
    %9 = tpu.iota {dimensions = array<i32: 0>} : vector<16x1xi32>
    %c16_i32 = arith.constant 16 : i32
    %c0_i32 = arith.constant 0 : i32
    %10 = arith.cmpi eq, %c16_i32, %c0_i32 : i32
    %c1_i32 = arith.constant 1 : i32
    %11 = arith.select %10, %c1_i32, %c16_i32 : i32
    %12 = vector.broadcast %11 : i32 to vector<16x1xi32>
    %13 = arith.remsi %9, %12 : vector<16x1xi32>
    %c0_i32_10 = arith.constant 0 : i32
    %14 = vector.broadcast %c0_i32_10 : i32 to vector<16x1xi32>
    %15 = arith.cmpi ne, %13, %14 : vector<16x1xi32>
    %c0_i32_11 = arith.constant 0 : i32
    %16 = vector.broadcast %c0_i32_11 : i32 to vector<16x1xi32>
    %17 = arith.cmpi slt, %13, %16 : vector<16x1xi32>
    %c0_i32_12 = arith.constant 0 : i32
    %18 = arith.cmpi slt, %11, %c0_i32_12 : i32
    %19 = vector.broadcast %18 : i1 to vector<16x1xi1>
    %20 = vector.broadcast %19 : vector<16x1xi1> to vector<16x1xi1>
    %21 = arith.xori %17, %20 : vector<16x1xi1>
    %22 = arith.andi %21, %15 : vector<16x1xi1>
    %23 = vector.broadcast %11 : i32 to vector<16x1xi32>
    %24 = arith.addi %13, %23 : vector<16x1xi32>
    %25 = arith.select %22, %24, %13 : vector<16x1xi1>, vector<16x1xi32>
    %c0_i32_13 = arith.constant 0 : i32
    %26 = vector.broadcast %c0_i32_13 : i32 to vector<16x1xi32>
    %27 = arith.cmpi eq, %25, %26 : vector<16x1xi32>
    %c1_i32_14 = arith.constant 1 : i32
    %28 = tpu.dynamic_rotate %8 by %c1_i32_14 dim 0 : vector<16x4xf32>, i32 -> vector<16x4xf32>
    %cst = arith.constant 0.000000e+00 : f32
    %29 = vector.shape_cast %27 : vector<16x1xi1> to vector<16x1xi1>
    %30 = vector.broadcast %29 : vector<16x1xi1> to vector<16x4xi1>
    %31 = vector.broadcast %cst : f32 to vector<16x4xf32>
    %32 = arith.select %30, %31, %28 : vector<16x4xi1>, vector<16x4xf32>
    %c15_i32 = arith.constant 15 : i32
    %33 = vector.broadcast %c15_i32 : i32 to vector<16x1xi32>
    %34 = arith.cmpi eq, %25, %33 : vector<16x1xi32>
    %c15_i32_15 = arith.constant 15 : i32
    %35 = tpu.dynamic_rotate %8 by %c15_i32_15 dim 0 : vector<16x4xf32>, i32 -> vector<16x4xf32>
    %cst_16 = arith.constant 0.000000e+00 : f32
    %36 = vector.shape_cast %34 : vector<16x1xi1> to vector<16x1xi1>
    %37 = vector.broadcast %36 : vector<16x1xi1> to vector<16x4xi1>
    %38 = vector.broadcast %cst_16 : f32 to vector<16x4xf32>
    %39 = arith.select %37, %38, %35 : vector<16x4xi1>, vector<16x4xf32>
    %40 = arith.truncf %32 : vector<16x4xf32> to vector<16x4xbf16>
    %c0_17 = arith.constant 0 : index
    %c0_18 = arith.constant 0 : index
    %c0_19 = arith.constant 0 : index
    %41 = vector.load %arg2[%c0_17, %c0_18, %c0_19] : memref<3x4x128xbf16, #tpu.memory_space<vmem>>, vector<1x4x128xbf16>
    %42 = vector.shape_cast %41 : vector<1x4x128xbf16> to vector<4x128xbf16>
    %cst_20 = arith.constant dense<0.000000e+00> : vector<16x128xf32>
    %43 = tpu.matmul %40, %42, %cst_20 {dimension_numbers = #tpu.dot_dimension_numbers<[1], [0], [0], [1], [0, 0, 1, 1], [], []>} : vector<16x4xbf16>, vector<4x128xbf16>, vector<16x128xf32> -> vector<16x128xf32>
    %44 = arith.truncf %8 : vector<16x4xf32> to vector<16x4xbf16>
    %c1_21 = arith.constant 1 : index
    %c0_22 = arith.constant 0 : index
    %c0_23 = arith.constant 0 : index
    %45 = vector.load %arg2[%c1_21, %c0_22, %c0_23] : memref<3x4x128xbf16, #tpu.memory_space<vmem>>, vector<1x4x128xbf16>
    %46 = vector.shape_cast %45 : vector<1x4x128xbf16> to vector<4x128xbf16>
    %cst_24 = arith.constant dense<0.000000e+00> : vector<16x128xf32>
    %47 = tpu.matmul %44, %46, %cst_24 {dimension_numbers = #tpu.dot_dimension_numbers<[1], [0], [0], [1], [0, 0, 1, 1], [], []>} : vector<16x4xbf16>, vector<4x128xbf16>, vector<16x128xf32> -> vector<16x128xf32>
    %48 = arith.addf %43, %47 : vector<16x128xf32>
    %49 = arith.truncf %39 : vector<16x4xf32> to vector<16x4xbf16>
    %c2_25 = arith.constant 2 : index
    %c0_26 = arith.constant 0 : index
    %c0_27 = arith.constant 0 : index
    %50 = vector.load %arg2[%c2_25, %c0_26, %c0_27] : memref<3x4x128xbf16, #tpu.memory_space<vmem>>, vector<1x4x128xbf16>
    %51 = vector.shape_cast %50 : vector<1x4x128xbf16> to vector<4x128xbf16>
    %cst_28 = arith.constant dense<0.000000e+00> : vector<16x128xf32>
    %52 = tpu.matmul %49, %51, %cst_28 {dimension_numbers = #tpu.dot_dimension_numbers<[1], [0], [0], [1], [0, 0, 1, 1], [], []>} : vector<16x4xbf16>, vector<4x128xbf16>, vector<16x128xf32> -> vector<16x128xf32>
    %53 = arith.addf %48, %52 : vector<16x128xf32>
    %54 = vector.broadcast %0 : vector<1x128xf32> to vector<16x128xf32>
    %55 = arith.addf %53, %54 : vector<16x128xf32>
    %cst_29 = arith.constant 0.000000e+00 : f32
    %56 = vector.broadcast %cst_29 : f32 to vector<16x128xf32>
    %57 = arith.maximumf %55, %56 : vector<16x128xf32>
    %58 = arith.truncf %57 : vector<16x128xf32> to vector<16x128xbf16>
    %c0_30 = arith.constant 0 : index
    %c0_31 = arith.constant 0 : index
    %59 = vector.load %arg3[%c0_30, %c0_31] : memref<128x128xbf16, #tpu.memory_space<vmem>>, vector<128x128xbf16>
    %cst_32 = arith.constant dense<0.000000e+00> : vector<16x128xf32>
    %60 = tpu.matmul %58, %59, %cst_32 {dimension_numbers = #tpu.dot_dimension_numbers<[1], [0], [0], [1], [0, 0, 1, 1], [], []>} : vector<16x128xbf16>, vector<128x128xbf16>, vector<16x128xf32> -> vector<16x128xf32>
    %61 = vector.broadcast %1 : vector<1x128xf32> to vector<16x128xf32>
    %62 = arith.addf %60, %61 : vector<16x128xf32>
    %63 = arith.truncf %62 : vector<16x128xf32> to vector<16x128xbf16>
    %c0_33 = arith.constant 0 : index
    %c0_34 = arith.constant 0 : index
    %64 = vector.load %arg4[%c0_33, %c0_34] : memref<128x384xbf16, #tpu.memory_space<vmem>>, vector<128x384xbf16>
    %cst_35 = arith.constant dense<0.000000e+00> : vector<16x384xf32>
    %65 = tpu.matmul %63, %64, %cst_35 {dimension_numbers = #tpu.dot_dimension_numbers<[1], [0], [0], [1], [0, 0, 1, 1], [], []>} : vector<16x128xbf16>, vector<128x384xbf16>, vector<16x384xf32> -> vector<16x384xf32>
    %66 = vector.broadcast %2 : vector<1x384xf32> to vector<16x384xf32>
    %67 = arith.addf %65, %66 : vector<16x384xf32>
    %68 = vector.extract_strided_slice %67 {offsets = [0, 0], sizes = [16, 128], strides = [1, 1]} : vector<16x384xf32> to vector<16x128xf32>
    %69 = vector.shape_cast %68 : vector<16x128xf32> to vector<1x16x128xf32>
    %70 = vector.extract_strided_slice %67 {offsets = [0, 128], sizes = [16, 128], strides = [1, 1]} : vector<16x384xf32> to vector<16x128xf32>
    %71 = vector.shape_cast %70 : vector<16x128xf32> to vector<1x16x128xf32>
    %72 = vector.extract_strided_slice %67 {offsets = [0, 256], sizes = [16, 128], strides = [1, 1]} : vector<16x384xf32> to vector<16x128xf32>
    %73 = vector.shape_cast %72 : vector<16x128xf32> to vector<1x16x128xf32>
    %74 = arith.truncf %69 : vector<1x16x128xf32> to vector<1x16x128xbf16>
    %75 = arith.truncf %71 : vector<1x16x128xf32> to vector<1x16x128xbf16>
    "tpu.trace_start"() <{level = 10 : i32, message = "bqd,bkd->bqk"}> : () -> ()
    %cst_36 = arith.constant dense<0.000000e+00> : vector<1x16x16xf32>
    %76 = tpu.matmul %74, %75, %cst_36 {dimension_numbers = #tpu.dot_dimension_numbers<[2], [2], [1], [1], [0, 0, 0, 1, 1, 1], [0], [0]>} : vector<1x16x128xbf16>, vector<1x16x128xbf16>, vector<1x16x16xf32> -> vector<1x16x16xf32>
    "tpu.trace_stop"() : () -> ()
    %cst_37 = arith.constant dense<0xFF800000> : vector<1x16xf32>
    %77 = vector.multi_reduction <maximumf>, %76, %cst_37 [2] : vector<1x16x16xf32> to vector<1x16xf32>
    %78 = vector.shape_cast %77 : vector<1x16xf32> to vector<1x16x1xf32>
    %79 = vector.broadcast %78 : vector<1x16x1xf32> to vector<1x16x16xf32>
    %80 = arith.subf %76, %79 : vector<1x16x16xf32>
    %81 = math.exp %80 : vector<1x16x16xf32>
    %cst_38 = arith.constant dense<0.000000e+00> : vector<1x16xf32>
    %82 = vector.multi_reduction <add>, %81, %cst_38 [2] : vector<1x16x16xf32> to vector<1x16xf32>
    %83 = vector.shape_cast %82 : vector<1x16xf32> to vector<1x16x1xf32>
    %84 = tpu.reciprocal %83 : vector<1x16x1xf32> -> vector<1x16x1xf32>
    %85 = vector.broadcast %84 : vector<1x16x1xf32> to vector<1x16x16xf32>
    %86 = arith.mulf %81, %85 : vector<1x16x16xf32>
    %87 = arith.truncf %86 : vector<1x16x16xf32> to vector<1x16x16xbf16>
    %88 = arith.truncf %73 : vector<1x16x128xf32> to vector<1x16x128xbf16>
    "tpu.trace_start"() <{level = 10 : i32, message = "bqk,bkd->bqd"}> : () -> ()
    %cst_39 = arith.constant dense<0.000000e+00> : vector<1x16x128xf32>
    %89 = tpu.matmul %87, %88, %cst_39 {dimension_numbers = #tpu.dot_dimension_numbers<[2], [1], [1], [2], [0, 0, 0, 1, 1, 2], [0], [0]>} : vector<1x16x16xbf16>, vector<1x16x128xbf16>, vector<1x16x128xf32> -> vector<1x16x128xf32>
    "tpu.trace_stop"() : () -> ()
    %90 = vector.shape_cast %89 : vector<1x16x128xf32> to vector<16x128xf32>
    %91 = arith.truncf %90 : vector<16x128xf32> to vector<16x128xbf16>
    %c0_40 = arith.constant 0 : index
    %c0_41 = arith.constant 0 : index
    %92 = vector.load %arg5[%c0_40, %c0_41] : memref<128x128xbf16, #tpu.memory_space<vmem>>, vector<128x128xbf16>
    %cst_42 = arith.constant dense<0.000000e+00> : vector<16x128xf32>
    %93 = tpu.matmul %91, %92, %cst_42 {dimension_numbers = #tpu.dot_dimension_numbers<[1], [0], [0], [1], [0, 0, 1, 1], [], []>} : vector<16x128xbf16>, vector<128x128xbf16>, vector<16x128xf32> -> vector<16x128xf32>
    %94 = arith.addf %62, %93 : vector<16x128xf32>
    %95 = vector.broadcast %3 : vector<1x128xf32> to vector<16x128xf32>
    %96 = arith.addf %94, %95 : vector<16x128xf32>
    %97 = arith.truncf %96 : vector<16x128xf32> to vector<16x128xbf16>
    %c0_43 = arith.constant 0 : index
    %c0_44 = arith.constant 0 : index
    %98 = vector.load %arg6[%c0_43, %c0_44] : memref<128x128xbf16, #tpu.memory_space<vmem>>, vector<128x128xbf16>
    %cst_45 = arith.constant dense<0.000000e+00> : vector<16x128xf32>
    %99 = tpu.matmul %97, %98, %cst_45 {dimension_numbers = #tpu.dot_dimension_numbers<[1], [0], [0], [1], [0, 0, 1, 1], [], []>} : vector<16x128xbf16>, vector<128x128xbf16>, vector<16x128xf32> -> vector<16x128xf32>
    %100 = vector.broadcast %4 : vector<1x128xf32> to vector<16x128xf32>
    %101 = arith.addf %99, %100 : vector<16x128xf32>
    %cst_46 = arith.constant 0.000000e+00 : f32
    %102 = vector.broadcast %cst_46 : f32 to vector<16x128xf32>
    %103 = arith.maximumf %101, %102 : vector<16x128xf32>
    %104 = arith.truncf %103 : vector<16x128xf32> to vector<16x128xbf16>
    %c0_47 = arith.constant 0 : index
    %c0_48 = arith.constant 0 : index
    %105 = vector.load %arg7[%c0_47, %c0_48] : memref<128x128xbf16, #tpu.memory_space<vmem>>, vector<128x128xbf16>
    %cst_49 = arith.constant dense<0.000000e+00> : vector<16x128xf32>
    %106 = tpu.matmul %104, %105, %cst_49 {dimension_numbers = #tpu.dot_dimension_numbers<[1], [0], [0], [1], [0, 0, 1, 1], [], []>} : vector<16x128xbf16>, vector<128x128xbf16>, vector<16x128xf32> -> vector<16x128xf32>
    %107 = arith.addf %96, %106 : vector<16x128xf32>
    %108 = vector.broadcast %5 : vector<1x128xf32> to vector<16x128xf32>
    %109 = arith.addf %107, %108 : vector<16x128xf32>
    %110 = vector.shape_cast %109 : vector<16x128xf32> to vector<1x16x128xf32>
    %cst_50 = arith.constant dense<0.000000e+00> : vector<1x128xf32>
    %111 = vector.multi_reduction <add>, %110, %cst_50 [1] : vector<1x16x128xf32> to vector<1x128xf32>
    %112 = arith.truncf %111 : vector<1x128xf32> to vector<1x128xbf16>
    %c0_51 = arith.constant 0 : index
    %c0_52 = arith.constant 0 : index
    %113 = vector.load %arg8[%c0_51, %c0_52] : memref<128x128xbf16, #tpu.memory_space<vmem>>, vector<128x128xbf16>
    %cst_53 = arith.constant dense<0.000000e+00> : vector<1x128xf32>
    %114 = tpu.matmul %112, %113, %cst_53 {dimension_numbers = #tpu.dot_dimension_numbers<[1], [0], [0], [1], [0, 0, 1, 1], [], []>} : vector<1x128xbf16>, vector<128x128xbf16>, vector<1x128xf32> -> vector<1x128xf32>
    %115 = arith.addf %114, %6 : vector<1x128xf32>
    %c0_54 = arith.constant 0 : index
    %c0_55 = arith.constant 0 : index
    %c0_56 = arith.constant 0 : index
    %116 = vector.load %arg10[%c0_54, %c0_55, %c0_56] : memref<1x1x128xf32, #tpu.memory_space<vmem>>, vector<1x1x128xf32>
    %117 = vector.shape_cast %116 : vector<1x1x128xf32> to vector<1x128xf32>
    %118 = vector.shape_cast %115 : vector<1x128xf32> to vector<1x1x128xf32>
    tpu.vector_store %arg10[%c0_54, %c0_55, %c0_56], %118 {strides = array<i32>} : memref<1x1x128xf32, #tpu.memory_space<vmem>>, vector<1x1x128xf32>,
    return
  }
  func.func @transform_0(%arg0: i32) -> (i32, i32, i32) {
    %c0_i32 = arith.constant 0 : i32
    %c0_i32_0 = arith.constant 0 : i32
    %c0_i32_1 = arith.constant 0 : i32
    return %arg0, %c0_i32, %c0_i32_0 : i32, i32, i32
  }
  func.func @transform_1(%arg0: i32) -> (i32, i32, i32) {
    %c0_i32 = arith.constant 0 : i32
    %c0_i32_0 = arith.constant 0 : i32
    %c0_i32_1 = arith.constant 0 : i32
    %c0_i32_2 = arith.constant 0 : i32
    return %c0_i32, %c0_i32_0, %c0_i32_1 : i32, i32, i32
  }
  func.func @transform_2(%arg0: i32) -> (i32, i32) {
    %c0_i32 = arith.constant 0 : i32
    %c0_i32_0 = arith.constant 0 : i32
    %c0_i32_1 = arith.constant 0 : i32
    return %c0_i32, %c0_i32_0 : i32, i32
  }
  func.func @transform_3(%arg0: i32) -> (i32, i32) {
    %c0_i32 = arith.constant 0 : i32
    %c0_i32_0 = arith.constant 0 : i32
    %c0_i32_1 = arith.constant 0 : i32
    return %c0_i32, %c0_i32_0 : i32, i32
  }
  func.func @transform_4(%arg0: i32) -> (i32, i32) {
    %c0_i32 = arith.constant 0 : i32
    %c0_i32_0 = arith.constant 0 : i32
    %c0_i32_1 = arith.constant 0 : i32
    return %c0_i32, %c0_i32_0 : i32, i32
  }
  func.func @transform_5(%arg0: i32) -> (i32, i32) {
    %c0_i32 = arith.constant 0 : i32
    %c0_i32_0 = arith.constant 0 : i32
    %c0_i32_1 = arith.constant 0 : i32
    return %c0_i32, %c0_i32_0 : i32, i32
  }
  func.func @transform_6(%arg0: i32) -> (i32, i32) {
    %c0_i32 = arith.constant 0 : i32
    %c0_i32_0 = arith.constant 0 : i32
    %c0_i32_1 = arith.constant 0 : i32
    return %c0_i32, %c0_i32_0 : i32, i32
  }
  func.func @transform_7(%arg0: i32) -> (i32, i32) {
    %c0_i32 = arith.constant 0 : i32
    %c0_i32_0 = arith.constant 0 : i32
    %c0_i32_1 = arith.constant 0 : i32
    return %c0_i32, %c0_i32_0 : i32, i32
  }
  func.func @transform_8(%arg0: i32) -> (i32, i32) {
    %c0_i32 = arith.constant 0 : i32
    %c0_i32_0 = arith.constant 0 : i32
    %c0_i32_1 = arith.constant 0 : i32
    return %c0_i32, %c0_i32_0 : i32, i32
  }
  func.func @transform_9(%arg0: i32) -> (i32, i32, i32) {
    %c0_i32 = arith.constant 0 : i32
    %c0_i32_0 = arith.constant 0 : i32
    %c0_i32_1 = arith.constant 0 : i32
    return %arg0, %c0_i32, %c0_i32_0 : i32, i32, i32
  }
}

</mosaic_0001>

<llo_original>
// kernel: tpu_custom_call.1
$region0: #{tpu_custom_call.1}
  #allocation0 [shape = 'u32[]', space=smem, size = 0x4, offset = 0x4, fixed_abs, tag = 'smem constant byte address 0x4 - core index']
  #allocation1 [shape = 'u32[144,128]{1,0:T(1,128)}', space=vmem, size = 0x12000, scoped, tag = 'internal scratch']
  %s0 = inlined_call_operand.vmem [shape: f32[2,16,4], index: 0, kind: input, shape index: {}]
  %s1 = inlined_call_operand.vmem [shape: bf16[3,4,128], index: 1, kind: input, shape index: {}]
  %s2 = inlined_call_operand.hbm [shape: bf16[128,128], index: 2, kind: input, shape index: {}]
  %s3 = inlined_call_operand.hbm [shape: bf16[128,384], index: 3, kind: input, shape index: {}]
  %s4 = inlined_call_operand.hbm [shape: bf16[128,128], index: 4, kind: input, shape index: {}]
  %s5 = inlined_call_operand.hbm [shape: bf16[128,128], index: 5, kind: input, shape index: {}]
  %s6 = inlined_call_operand.hbm [shape: bf16[128,128], index: 6, kind: input, shape index: {}]
  %s7 = inlined_call_operand.hbm [shape: bf16[128,128], index: 7, kind: input, shape index: {}]
  %s8 = inlined_call_operand.vmem [shape: f32[8,384], index: 8, kind: input, shape index: {}]
  %s9 = inlined_call_operand.hbm [shape: f32[2,1,128], index: 9, kind: output, shape index: {}]
  %s10 = sld [smem:[#allocation0]]
  $region93: #{tpu_custom_call.1} parent=0
    _
  %s12 = ssub.s32 1, %s10
  %s13 = scalar_select 0, %s12, %s10
  $region1: #{tpu_custom_call.1} parent=0
    #allocation2 [shape = 'u8[32768]{0}', space=vmem, size = 0x8000, scoped, tag = 'input window, operand 2, single buffered']
    #allocation3 [shape = 's32[2]{0}', space=sflag, size = 0x8, scoped, tag = 'scoped memory for tpu_custom_call.1']
    #allocation4 [shape = 's32[2]{0}', space=sflag, size = 0x8, scoped, tag = 'scoped memory for tpu_custom_call.1']
    #allocation5 [shape = 'u8[98304]{0}', space=vmem, size = 0x18000, scoped, tag = 'input window, operand 3, single buffered']
    #allocation6 [shape = 's32[1]{0}', space=sflag, size = 0x4, scoped, tag = 'scoped memory for tpu_custom_call.1']
    #allocation7 [shape = 'u8[32768]{0}', space=vmem, size = 0x8000, scoped, tag = 'input window, operand 4, single buffered']
    #allocation8 [shape = 'u8[32768]{0}', space=vmem, size = 0x8000, scoped, tag = 'input window, operand 5, single buffered']
    #allocation9 [shape = 's32[1]{0}', space=sflag, size = 0x4, scoped, tag = 'scoped memory for tpu_custom_call.1']
    #allocation10 [shape = 'u8[32768]{0}', space=vmem, size = 0x8000, scoped, tag = 'input window, operand 6, single buffered']
    #allocation11 [shape = 'u8[32768]{0}', space=vmem, size = 0x8000, scoped, tag = 'input window, operand 7, single buffered']
    #allocation12 [shape = 's32[1]{0}', space=sflag, size = 0x4, scoped, tag = 'scoped memory for tpu_custom_call.1']
    #allocation13 [shape = 'u8[1024]{0}', space=vmem, size = 0x400, scoped, tag = 'output window, operand 0']
    %14 = vsyncpa [#allocation3], 0
    %15 = vsyncpa [#allocation6], 0
    %16 = vsyncpa [#allocation9], 0
    %17 = vsyncpa [#allocation12], 0
    %18 = vsyncpa [#allocation4], 0
    %s19 = scalar_lea.sflag [#allocation4], 1
    %20 = vsyncpa %s19, 0
    loop: start=0, step=1, limit=4
    $region2: #{tpu_custom_call.1} parent=1 // loop_pre_header
      _
    $region3: #{tpu_custom_call.1} parent=1 // loop_header
      %s22 = sphi 0, %s26
      %p23 = scmp.ge.s32.totalorder %s22, 4
      %s32 = sphi 0, %s34
      %s35 = sphi 0, %s32
      %s36 = sphi 0, %s35
      %s52 = sphi 0, %s36
      %s56 = sphi 0, %s56
      %s58 = sphi 0, %s56
      %s59 = sphi 0, %s58
      %s73 = sphi 0, %s59
      %s77 = sphi 0, %s77
      %s79 = sphi 0, %s77
      %s80 = sphi 0, %s79
      %s94 = sphi 0, %s80
      %s98 = sphi 0, %s98
      %s100 = sphi 0, %s98
      %s101 = sphi 0, %s100
      %s115 = sphi 0, %s101
      %s119 = sphi 0, %s119
      %s121 = sphi 0, %s119
      %s122 = sphi 0, %s121
      %s136 = sphi 0, %s122
      %s140 = sphi 0, %s140
      %s142 = sphi 0, %s140
      %s143 = sphi 0, %s142
      %s157 = sphi 0, %s143
      %s161 = sphi 0, %s161
      %s163 = sphi 0, %s161
      %s164 = sphi 0, %s163
      %s178 = sphi 0, %s164
      %s182 = sphi 0, %s182
      %s184 = sphi 0, %s182
      %s185 = sphi 0, %s184
      %s199 = sphi 0, %s185
      %s203 = sphi 0, %s203
      %s205 = sphi 0, %s203
      %s206 = sphi 0, %s205
      %s220 = sphi 0, %s206
      %s226 = sphi 0, %s228
      %s229 = sphi 0, %s226
      %s230 = sphi 0, %s229
      %s246 = sphi 0, %s230
    $region4: #{tpu_custom_call.1} parent=1 // loop_header_branch
      %25 = sbr.rel (%p23) target = $region8
    $region5: #{tpu_custom_call.1} parent=1 // loop_body
      %s27 = ssub.s32 %s22, 1
      %s28 = ssub.s32 %s22, 2
      %s29 = sadd.s32 %s22, 1
      %s30 = ssub.s32 %s22, %s29
      %p31 = scmp.eq.s32.totalorder %s30, 0
      %s33 = sadd.s32 %s32, 1
      %s34 = scalar_select %p31, %s32, %s33
      %p37 = pneg %p31
      %p38 = scmp.eq.s32.totalorder %s22, 1
      %p39 = por %p37, %p38
      %p40 = scmp.ne.s32.totalorder %s32, %s35
      %p41 = scmp.eq.s32.totalorder %s22, 0
      %p42 = por %p40, %p41
      %p43 = scmp.ne.s32.totalorder %s32, %s35
      %p44 = scmp.eq.s32.totalorder %s27, 1
      %p45 = por %p43, %p44
      %p46 = scmp.ne.s32.totalorder %s35, %s36
      %p47 = scmp.eq.s32.totalorder %s27, 0
      %p48 = por %p46, %p47
      %p49 = scmp.ne.s32.totalorder %s35, %s36
      %p50 = scmp.eq.s32.totalorder %s28, 1
      %p51 = por %p49, %p50
      %p53 = scmp.ne.s32.totalorder %s36, %s52
      %p54 = scmp.eq.s32.totalorder %s28, 0
      %p55 = por %p53, %p54
      %s57 = sadd.s32 %s56, 1
      %p60 = scmp.eq.s32.totalorder %s22, 1
      %p61 = scmp.ne.s32.totalorder %s56, %s58
      %p62 = scmp.eq.s32.totalorder %s22, 0
      %p63 = por %p61, %p62
      %p64 = scmp.ne.s32.totalorder %s56, %s58
      %p65 = scmp.eq.s32.totalorder %s27, 1
      %p66 = por %p64, %p65
      %p67 = scmp.ne.s32.totalorder %s58, %s59
      %p68 = scmp.eq.s32.totalorder %s27, 0
      %p69 = por %p67, %p68
      %p70 = scmp.ne.s32.totalorder %s58, %s59
      %p71 = scmp.eq.s32.totalorder %s28, 1
      %p72 = por %p70, %p71
      %p74 = scmp.ne.s32.totalorder %s59, %s73
      %p75 = scmp.eq.s32.totalorder %s28, 0
      %p76 = por %p74, %p75
      %s78 = sadd.s32 %s77, 1
      %p81 = scmp.eq.s32.totalorder %s22, 1
      %p82 = scmp.ne.s32.totalorder %s77, %s79
      %p83 = scmp.eq.s32.totalorder %s22, 0
      %p84 = por %p82, %p83
      %p85 = scmp.ne.s32.totalorder %s77, %s79
      %p86 = scmp.eq.s32.totalorder %s27, 1
      %p87 = por %p85, %p86
      %p88 = scmp.ne.s32.totalorder %s79, %s80
      %p89 = scmp.eq.s32.totalorder %s27, 0
      %p90 = por %p88, %p89
      %p91 = scmp.ne.s32.totalorder %s79, %s80
      %p92 = scmp.eq.s32.totalorder %s28, 1
      %p93 = por %p91, %p92
      %p95 = scmp.ne.s32.totalorder %s80, %s94
      %p96 = scmp.eq.s32.totalorder %s28, 0
      %p97 = por %p95, %p96
      %s99 = sadd.s32 %s98, 1
      %p102 = scmp.eq.s32.totalorder %s22, 1
      %p103 = scmp.ne.s32.totalorder %s98, %s100
      %p104 = scmp.eq.s32.totalorder %s22, 0
      %p105 = por %p103, %p104
      %p106 = scmp.ne.s32.totalorder %s98, %s100
      %p107 = scmp.eq.s32.totalorder %s27, 1
      %p108 = por %p106, %p107
      %p109 = scmp.ne.s32.totalorder %s100, %s101
      %p110 = scmp.eq.s32.totalorder %s27, 0
      %p111 = por %p109, %p110
      %p112 = scmp.ne.s32.totalorder %s100, %s101
      %p113 = scmp.eq.s32.totalorder %s28, 1
      %p114 = por %p112, %p113
      %p116 = scmp.ne.s32.totalorder %s101, %s115
      %p117 = scmp.eq.s32.totalorder %s28, 0
      %p118 = por %p116, %p117
      %s120 = sadd.s32 %s119, 1
      %p123 = scmp.eq.s32.totalorder %s22, 1
      %p124 = scmp.ne.s32.totalorder %s119, %s121
      %p125 = scmp.eq.s32.totalorder %s22, 0
      %p126 = por %p124, %p125
      %p127 = scmp.ne.s32.totalorder %s119, %s121
      %p128 = scmp.eq.s32.totalorder %s27, 1
      %p129 = por %p127, %p128
      %p130 = scmp.ne.s32.totalorder %s121, %s122
      %p131 = scmp.eq.s32.totalorder %s27, 0
      %p132 = por %p130, %p131
      %p133 = scmp.ne.s32.totalorder %s121, %s122
      %p134 = scmp.eq.s32.totalorder %s28, 1
      %p135 = por %p133, %p134
      %p137 = scmp.ne.s32.totalorder %s122, %s136
      %p138 = scmp.eq.s32.totalorder %s28, 0
      %p139 = por %p137, %p138
      %s141 = sadd.s32 %s140, 1
      %p144 = scmp.eq.s32.totalorder %s22, 1
      %p145 = scmp.ne.s32.totalorder %s140, %s142
      %p146 = scmp.eq.s32.totalorder %s22, 0
      %p147 = por %p145, %p146
      %p148 = scmp.ne.s32.totalorder %s140, %s142
      %p149 = scmp.eq.s32.totalorder %s27, 1
      %p150 = por %p148, %p149
      %p151 = scmp.ne.s32.totalorder %s142, %s143
      %p152 = scmp.eq.s32.totalorder %s27, 0
      %p153 = por %p151, %p152
      %p154 = scmp.ne.s32.totalorder %s142, %s143
      %p155 = scmp.eq.s32.totalorder %s28, 1
      %p156 = por %p154, %p155
      %p158 = scmp.ne.s32.totalorder %s143, %s157
      %p159 = scmp.eq.s32.totalorder %s28, 0
      %p160 = por %p158, %p159
      %s162 = sadd.s32 %s161, 1
      %p165 = scmp.eq.s32.totalorder %s22, 1
      %p166 = scmp.ne.s32.totalorder %s161, %s163
      %p167 = scmp.eq.s32.totalorder %s22, 0
      %p168 = por %p166, %p167
      %p169 = scmp.ne.s32.totalorder %s161, %s163
      %p170 = scmp.eq.s32.totalorder %s27, 1
      %p171 = por %p169, %p170
      %p172 = scmp.ne.s32.totalorder %s163, %s164
      %p173 = scmp.eq.s32.totalorder %s27, 0
      %p174 = por %p172, %p173
      %p175 = scmp.ne.s32.totalorder %s163, %s164
      %p176 = scmp.eq.s32.totalorder %s28, 1
      %p177 = por %p175, %p176
      %p179 = scmp.ne.s32.totalorder %s164, %s178
      %p180 = scmp.eq.s32.totalorder %s28, 0
      %p181 = por %p179, %p180
      %s183 = sadd.s32 %s182, 1
      %p186 = scmp.eq.s32.totalorder %s22, 1
      %p187 = scmp.ne.s32.totalorder %s182, %s184
      %p188 = scmp.eq.s32.totalorder %s22, 0
      %p189 = por %p187, %p188
      %p190 = scmp.ne.s32.totalorder %s182, %s184
      %p191 = scmp.eq.s32.totalorder %s27, 1
      %p192 = por %p190, %p191
      %p193 = scmp.ne.s32.totalorder %s184, %s185
      %p194 = scmp.eq.s32.totalorder %s27, 0
      %p195 = por %p193, %p194
      %p196 = scmp.ne.s32.totalorder %s184, %s185
      %p197 = scmp.eq.s32.totalorder %s28, 1
      %p198 = por %p196, %p197
      %p200 = scmp.ne.s32.totalorder %s185, %s199
      %p201 = scmp.eq.s32.totalorder %s28, 0
      %p202 = por %p200, %p201
      %s204 = sadd.s32 %s203, 1
      %p207 = scmp.eq.s32.totalorder %s22, 1
      %p208 = scmp.ne.s32.totalorder %s203, %s205
      %p209 = scmp.eq.s32.totalorder %s22, 0
      %p210 = por %p208, %p209
      %p211 = scmp.ne.s32.totalorder %s203, %s205
      %p212 = scmp.eq.s32.totalorder %s27, 1
      %p213 = por %p211, %p212
      %p214 = scmp.ne.s32.totalorder %s205, %s206
      %p215 = scmp.eq.s32.totalorder %s27, 0
      %p216 = por %p214, %p215
      %p217 = scmp.ne.s32.totalorder %s205, %s206
      %p218 = scmp.eq.s32.totalorder %s28, 1
      %p219 = por %p217, %p218
      %p221 = scmp.ne.s32.totalorder %s206, %s220
      %p222 = scmp.eq.s32.totalorder %s28, 0
      %p223 = por %p221, %p222
      %s224 = ssub.s32 %s22, %s29
      %p225 = scmp.eq.s32.totalorder %s224, 0
      %s227 = sadd.s32 %s226, 1
      %s228 = scalar_select %p225, %s226, %s227
      %p231 = pneg %p225
      %p232 = scmp.eq.s32.totalorder %s22, 1
      %p233 = por %p231, %p232
      %p234 = scmp.ne.s32.totalorder %s226, %s229
      %p235 = scmp.eq.s32.totalorder %s22, 0
      %p236 = por %p234, %p235
      %p237 = scmp.ne.s32.totalorder %s226, %s229
      %p238 = scmp.eq.s32.totalorder %s27, 1
      %p239 = por %p237, %p238
      %p240 = scmp.ne.s32.totalorder %s229, %s230
      %p241 = scmp.eq.s32.totalorder %s27, 0
      %p242 = por %p240, %p241
      %p243 = scmp.ne.s32.totalorder %s229, %s230
      %p244 = scmp.eq.s32.totalorder %s28, 1
      %p245 = por %p243, %p244
      %p247 = scmp.ne.s32.totalorder %s230, %s246
      %p248 = scmp.eq.s32.totalorder %s28, 0
      %p249 = por %p247, %p248
      %p250 = scmp.le.s32.totalorder 1, %s22
      %p251 = scmp.lt.s32.totalorder %s22, 3
      %p252 = pnand %p250, %p251
      %p253 = pneg %p252
      // Predicated region
      $region9: #{tpu_custom_call.1} parent=5 // pred_check
        _
      $region10: #{tpu_custom_call.1} parent=5 // pred_check_branch
        %255 = sbr.rel (%p252) target = $region12
      $region11: #{tpu_custom_call.1} parent=5 // pred_region
        %s256 = ssub.s32 %s22, 1
        // Predicated region
        $region13: #{tpu_custom_call.1} parent=11 // pred_check
          %p257 = pneg %p69
        $region14: #{tpu_custom_call.1} parent=11 // pred_check_branch
          %259 = sbr.rel (%p257) target = $region16
        $region15: #{tpu_custom_call.1} parent=11 // pred_region
          _
        $region16: #{tpu_custom_call.1} parent=11 // pred_fallthru
          _
        // Predicated region
        $region17: #{tpu_custom_call.1} parent=11 // pred_check
          %p260 = pneg %p90
        $region18: #{tpu_custom_call.1} parent=11 // pred_check_branch
          %262 = sbr.rel (%p260) target = $region20
        $region19: #{tpu_custom_call.1} parent=11 // pred_region
          %s264 = ssub.s32 1024, 1024
          %265 = vsyncadd [#allocation3], %s264
          %s266 = sshll.u32 [#allocation2], 4
          %s267 = int_to_ptr.vmem [resolvable:$true] %s266
          %272 = dma.hbm_to_vmem [thread:$0]  %s2, 1024, %s267, [#allocation3], 64, 64, 4
        $region20: #{tpu_custom_call.1} parent=11 // pred_fallthru
          _
        // Predicated region
        $region21: #{tpu_custom_call.1} parent=11 // pred_check
          %p273 = pneg %p111
        $region22: #{tpu_custom_call.1} parent=11 // pred_check_branch
          %275 = sbr.rel (%p273) target = $region24
        $region23: #{tpu_custom_call.1} parent=11 // pred_region
          %s277 = ssub.s32 3072, 3072
          %278 = vsyncadd [#allocation6], %s277
          %s279 = sshll.u32 [#allocation5], 4
          %s280 = int_to_ptr.vmem [resolvable:$true] %s279
          %285 = dma.hbm_to_vmem [thread:$0]  %s3, 3072, %s280, [#allocation6], 192, 192, 12
        $region24: #{tpu_custom_call.1} parent=11 // pred_fallthru
          _
        // Predicated region
        $region25: #{tpu_custom_call.1} parent=11 // pred_check
          %p286 = pneg %p132
        $region26: #{tpu_custom_call.1} parent=11 // pred_check_branch
          %288 = sbr.rel (%p286) target = $region28
        $region27: #{tpu_custom_call.1} parent=11 // pred_region
          %s290 = ssub.s32 1024, 1024
          %291 = vsyncadd [#allocation6], %s290
          %s292 = sshll.u32 [#allocation7], 4
          %s293 = int_to_ptr.vmem [resolvable:$true] %s292
          %298 = dma.hbm_to_vmem [thread:$0]  %s4, 1024, %s293, [#allocation6], 64, 64, 4
        $region28: #{tpu_custom_call.1} parent=11 // pred_fallthru
          _
        // Predicated region
        $region29: #{tpu_custom_call.1} parent=11 // pred_check
          %p299 = pneg %p153
        $region30: #{tpu_custom_call.1} parent=11 // pred_check_branch
          %301 = sbr.rel (%p299) target = $region32
        $region31: #{tpu_custom_call.1} parent=11 // pred_region
          %s303 = ssub.s32 1024, 1024
          %304 = vsyncadd [#allocation9], %s303
          %s305 = sshll.u32 [#allocation8], 4
          %s306 = int_to_ptr.vmem [resolvable:$true] %s305
          %311 = dma.hbm_to_vmem [thread:$0]  %s5, 1024, %s306, [#allocation9], 64, 64, 4
        $region32: #{tpu_custom_call.1} parent=11 // pred_fallthru
          _
        // Predicated region
        $region33: #{tpu_custom_call.1} parent=11 // pred_check
          %p312 = pneg %p174
        $region34: #{tpu_custom_call.1} parent=11 // pred_check_branch
          %314 = sbr.rel (%p312) target = $region36
        $region35: #{tpu_custom_call.1} parent=11 // pred_region
          %s316 = ssub.s32 1024, 1024
          %317 = vsyncadd [#allocation9], %s316
          %s318 = sshll.u32 [#allocation10], 4
          %s319 = int_to_ptr.vmem [resolvable:$true] %s318
          %324 = dma.hbm_to_vmem [thread:$0]  %s6, 1024, %s319, [#allocation9], 64, 64, 4
        $region36: #{tpu_custom_call.1} parent=11 // pred_fallthru
          _
        // Predicated region
        $region37: #{tpu_custom_call.1} parent=11 // pred_check
          %p325 = pneg %p195
        $region38: #{tpu_custom_call.1} parent=11 // pred_check_branch
          %327 = sbr.rel (%p325) target = $region40
        $region39: #{tpu_custom_call.1} parent=11 // pred_region
          %s329 = ssub.s32 1024, 1024
          %330 = vsyncadd [#allocation12], %s329
          %s331 = sshll.u32 [#allocation11], 4
          %s332 = int_to_ptr.vmem [resolvable:$true] %s331
          %337 = dma.hbm_to_vmem [thread:$0]  %s7, 1024, %s332, [#allocation12], 64, 64, 4
        $region40: #{tpu_custom_call.1} parent=11 // pred_fallthru
          _
        // Predicated region
        $region41: #{tpu_custom_call.1} parent=11 // pred_check
          %p338 = pneg %p216
        $region42: #{tpu_custom_call.1} parent=11 // pred_check_branch
          %340 = sbr.rel (%p338) target = $region44
        $region43: #{tpu_custom_call.1} parent=11 // pred_region
          _
        $region44: #{tpu_custom_call.1} parent=11 // pred_fallthru
          _
      $region12: #{tpu_custom_call.1} parent=5 // pred_fallthru
        _
      %p341 = scmp.lt.s32.totalorder %s22, 2
      // Predicated region
      $region45: #{tpu_custom_call.1} parent=5 // pred_check
        %p342 = pneg %p341
      $region46: #{tpu_custom_call.1} parent=5 // pred_check_branch
        %344 = sbr.rel (%p342) target = $region48
      $region47: #{tpu_custom_call.1} parent=5 // pred_region
        // Predicated region
        $region49: #{tpu_custom_call.1} parent=47 // pred_check
          %p345 = pneg %p42
        $region50: #{tpu_custom_call.1} parent=47 // pred_check_branch
          %347 = sbr.rel (%p345) target = $region52
        $region51: #{tpu_custom_call.1} parent=47 // pred_region
          %p348 = scmp.lt.s32.totalorder %s22, 1
          %s349 = scalar_select %p348, %s22, 1
          %s350 = smul.addr %s349, 2
          %s351 = smul.addr %s350, 8
          %s352 = scalar_lea.vmem %s0, %s351
        $region52: #{tpu_custom_call.1} parent=47 // pred_fallthru
          _
      $region48: #{tpu_custom_call.1} parent=5 // pred_fallthru
        _
      %p353 = scmp.le.s32.totalorder 1, %s22
      %p354 = scmp.lt.s32.totalorder %s22, 3
      %p355 = pnand %p353, %p354
      %p356 = pneg %p355
      // Predicated region
      $region53: #{tpu_custom_call.1} parent=5 // pred_check
        _
      $region54: #{tpu_custom_call.1} parent=5 // pred_check_branch
        %358 = sbr.rel (%p355) target = $region56
      $region55: #{tpu_custom_call.1} parent=5 // pred_region
        %s359 = ssub.s32 %s22, 1
        // Predicated region
        $region57: #{tpu_custom_call.1} parent=55 // pred_check
          %p360 = pneg %p90
        $region58: #{tpu_custom_call.1} parent=55 // pred_check_branch
          %362 = sbr.rel (%p360) target = $region60
        $region59: #{tpu_custom_call.1} parent=55 // pred_region
          %363 = dma.done [#allocation3], 1024
        $region60: #{tpu_custom_call.1} parent=55 // pred_fallthru
          _
        // Predicated region
        $region61: #{tpu_custom_call.1} parent=55 // pred_check
          %p364 = pneg %p111
        $region62: #{tpu_custom_call.1} parent=55 // pred_check_branch
          %366 = sbr.rel (%p364) target = $region64
        $region63: #{tpu_custom_call.1} parent=55 // pred_region
          %367 = dma.done [#allocation6], 3072
        $region64: #{tpu_custom_call.1} parent=55 // pred_fallthru
          _
        // Predicated region
        $region65: #{tpu_custom_call.1} parent=55 // pred_check
          %p368 = pneg %p132
        $region66: #{tpu_custom_call.1} parent=55 // pred_check_branch
          %370 = sbr.rel (%p368) target = $region68
        $region67: #{tpu_custom_call.1} parent=55 // pred_region
          %371 = dma.done [#allocation6], 1024
        $region68: #{tpu_custom_call.1} parent=55 // pred_fallthru
          _
        // Predicated region
        $region69: #{tpu_custom_call.1} parent=55 // pred_check
          %p372 = pneg %p153
        $region70: #{tpu_custom_call.1} parent=55 // pred_check_branch
          %374 = sbr.rel (%p372) target = $region72
        $region71: #{tpu_custom_call.1} parent=55 // pred_region
          %375 = dma.done [#allocation9], 1024
        $region72: #{tpu_custom_call.1} parent=55 // pred_fallthru
          _
        // Predicated region
        $region73: #{tpu_custom_call.1} parent=55 // pred_check
          %p376 = pneg %p174
        $region74: #{tpu_custom_call.1} parent=55 // pred_check_branch
          %378 = sbr.rel (%p376) target = $region76
        $region75: #{tpu_custom_call.1} parent=55 // pred_region
          %379 = dma.done [#allocation9], 1024
        $region76: #{tpu_custom_call.1} parent=55 // pred_fallthru
          _
        // Predicated region
        $region77: #{tpu_custom_call.1} parent=55 // pred_check
          %p380 = pneg %p195
        $region78: #{tpu_custom_call.1} parent=55 // pred_check_branch
          %382 = sbr.rel (%p380) target = $region80
        $region79: #{tpu_custom_call.1} parent=55 // pred_region
          %383 = dma.done [#allocation12], 1024
        $region80: #{tpu_custom_call.1} parent=55 // pred_fallthru
          _
        %p384 = scmp.lt.s32.totalorder %s27, 1
        %s385 = scalar_select %p384, %s27, 1
        %s386 = smul.addr %s385, 2
        %s387 = smul.addr %s386, 8
        %s388 = scalar_lea.vmem %s0, %s387
        %p389 = pneg %p48
        %p390 = pneg %p45
        %p391 = pneg %p69
        %p392 = pneg %p66
        %p393 = pneg %p90
        %p394 = pneg %p87
        %p395 = pneg %p111
        %p396 = pneg %p108
        %p397 = pneg %p132
        %p398 = pneg %p129
        %p399 = pneg %p153
        %p400 = pneg %p150
        %p401 = pneg %p174
        %p402 = pneg %p171
        %p403 = pneg %p195
        %p404 = pneg %p192
        %p405 = pneg %p216
        %p406 = pneg %p213
        %p407 = pneg %p242
        %p408 = pneg %p239
        %s409 = sand.u32 %s229, 1
        %s410 = scalar_lea.sflag [#allocation4], %s409
        %s411 = sand.u32 %s229, 1
        %s412 = scalar_lea.vmem [#allocation13], %s411
        %p413 = scmp.lt.s32.totalorder %s27, 1
        %s414 = scalar_select %p413, %s27, 1
        %s415 = smul.addr %s414, 2
        %s416 = smul.addr %s415, 8
        %s417 = scalar_lea.vmem %s0, %s416
        %v419 = vld [vmem:[%s8] ss:$0 sm:$0xff]
        %v420 = vld [vmem:[%s8 + $0x1] ss:$0 sm:$0xff]
        %s421 = scalar_lea.vmem %s8, 2
        %v422 = vld [vmem:[%s421] ss:$8 sm:$0x7]
        %v423 = vld [vmem:[%s8 + $0x3] ss:$0 sm:$0xff]
        %v424 = vld [vmem:[%s8 + $0x4] ss:$0 sm:$0xff]
        %v425 = vld [vmem:[%s8 + $0x5] ss:$0 sm:$0xff]
        %v426 = vld [vmem:[%s8 + $0x6] ss:$0 sm:$0xff]
        %v427 = vld [vmem:[%s417] sm:$0xff]
        %v428 = vld [vmem:[%s417 + $0x8] sm:$0xff]
        %v429 = vlaneseq
        %v430 = vshrl.u32 %v429, 7
        %v431 = vadd.s32 %v430, 8
        %vm432 = vcmp.lt.s32.totalorder %v430, 0
        %v433 = vsub.s32 0, %v430
        %v434 = vsel %vm432, %v433, %v430
        %v435 = vshrl.u32 %v434, 4
        %v436 = vand.u32 %v434, 15
        %v437 = vsub.s32 0, %v436
        %v438 = vsel %vm432, %v437, %v436
        %vm439 = vcmp.lt.s32.totalorder %v431, 0
        %v440 = vsub.s32 0, %v431
        %v441 = vsel %vm439, %v440, %v431
        %v442 = vshrl.u32 %v441, 4
        %v443 = vand.u32 %v441, 15
        %v444 = vsub.s32 0, %v443
        %v445 = vsel %vm439, %v444, %v443
        %vm446 = vcmp.ne.s32.totalorder %v438, 0
        %vm447 = vcmp.ne.s32.totalorder %v445, 0
        %vm448 = vcmp.lt.s32.totalorder %v438, 0
        %vm449 = vcmp.lt.s32.totalorder %v445, 0
        %vm450 = vmand %vm448, %vm446
        %vm451 = vmand %vm449, %vm447
        %v452 = vadd.s32 %v438, 16
        %v453 = vadd.s32 %v445, 16
        %v454 = vsel %vm450, %v452, %v438
        %v455 = vsel %vm451, %v453, %v445
        %vm456 = vcmp.eq.s32.totalorder %v454, 0
        %vm457 = vcmp.eq.s32.totalorder %v455, 0
        %v458 = vrot.slane %v427, 7
        %v459 = vrot.slane %v428, 7
        %vm460 = vcmp.lt.s32.totalorder %v430, 1
        %v461 = vsel %vm460, %v458, %v459
        %v462 = vsel %vm460, %v459, %v458
        %v463 = vsel %vm456, 1, 0
        %v464 = vsel %vm457, 1, 0
        %vm465 = vcmp.eq.s32.totalorder %v463, 1
        %vm466 = vcmp.eq.s32.totalorder %v464, 1
        %v467 = vsel %vm465, 0.0, %v462
        %v468 = vsel %vm466, 0.0, %v461
        %vm469 = vcmp.eq.s32.totalorder %v454, 15
        %vm470 = vcmp.eq.s32.totalorder %v455, 15
        %v471 = vrot.slane %v427, 1
        %v472 = vrot.slane %v428, 1
        %vm473 = vcmp.lt.s32.totalorder %v430, 7
        %v474 = vsel %vm473, %v471, %v472
        %v475 = vsel %vm473, %v472, %v471
        %v476 = vsel %vm469, 1, 0
        %v477 = vsel %vm470, 1, 0
        %vm478 = vcmp.eq.s32.totalorder %v476, 1
        %vm479 = vcmp.eq.s32.totalorder %v477, 1
        %v480 = vsel %vm478, 0.0, %v474
        %v481 = vsel %vm479, 0.0, %v475
        %v482 = vpack.c.bf16 %v468, %v467
        %v483 = vld [vmem:[%s1] sm:$0x3]
        %v484 = vpack.c.bf16 %v428, %v427
        %s485 = scalar_lea.vmem %s1, 2
        %v486 = vld [vmem:[%s485] sm:$0x3]
        %vm487 = vcmask 31744
        %v489 = vsel %vm487, %v484, 0
        %vm491 = vcmask 1041408
        %v493 = vsel %vm491, %v486, 0
        %495 = vmatprep.subr.bf16.mxu0 0
        %496 = vmatpush1.bf16.msra.mxu0 0
        %497 = vmatprep.subr.bf16.mxu0 0
        %498 = vmatpush1.bf16.msra.mxu0 0
        %499 = vmatprep.subr.bf16.mxu0 0
        %500 = vmatpush1.bf16.msra.mxu0 0
        %501 = vmatprep.subr.bf16.mxu0 0
        %502 = vmatpush1.bf16.msra.mxu0 0
        %503 = vmatprep.subr.bf16.mxu0 0
        %504 = vmatpush1.bf16.msra.mxu0 0
        %505 = vmatprep.subr.bf16.mxu0 0
        %506 = vmatpush1.bf16.msra.mxu0 0
        %507 = vmatprep.subr.bf16.mxu0 0
        %508 = vmatpush1.bf16.msra.mxu0 0
        %509 = vmatprep.subr.bf16.mxu0 0
        %510 = vmatpush1.bf16.msra.mxu0 %v493
        %511 = vmatprep.subr.bf16.mxu0 0
        %512 = vmatpush2.bf16.msra.mxu0 0
        %513 = vmatprep.subr.bf16.mxu0 0
        %514 = vmatpush2.bf16.msra.mxu0 0
        %515 = vmatprep.subr.bf16.mxu0 0
        %516 = vmatpush2.bf16.msra.mxu0 0
        %517 = vmatprep.subr.bf16.mxu0 0
        %518 = vmatpush2.bf16.msra.mxu0 0
        %519 = vmatprep.subr.bf16.mxu0 0
        %520 = vmatpush2.bf16.msra.mxu0 0
        %521 = vmatprep.subr.bf16.mxu0 0
        %522 = vmatpush2.bf16.msra.mxu0 0
        %523 = vmatprep.subr.bf16.mxu0 0
        %524 = vmatpush2.bf16.msra.mxu0 0
        %525 = vmatprep.subr.bf16.mxu0 0
        %526 = vmatpush2.bf16.msra.mxu0 0
        %527 = vmatprep.mubr.bf16.mxu0 0
        %528 = vmatmul.mubr.bf16.gmra.mxu0 %v489
        %v529 = vpop.f32.mrf.mxu0
        %v530 = vadd.f32 0.0, %v529
        %v531 = vpop.f32.mrf.mxu0
        %v532 = vpop.f32.mrf.mxu0
        %v533 = vadd.f32 0.0, %v532
        %v534 = vpop.f32.mrf.mxu0
        %535 = vdwg.mxu0
        %v537 = vsel %vm487, %v482, 0
        %v540 = vsel %vm491, %v483, 0
        %542 = vmatprep.subr.bf16.mxu0 0
        %543 = vmatpush1.bf16.msra.mxu0 0
        %544 = vmatprep.subr.bf16.mxu0 0
        %545 = vmatpush1.bf16.msra.mxu0 0
        %546 = vmatprep.subr.bf16.mxu0 0
        %547 = vmatpush1.bf16.msra.mxu0 0
        %548 = vmatprep.subr.bf16.mxu0 0
        %549 = vmatpush1.bf16.msra.mxu0 0
        %550 = vmatprep.subr.bf16.mxu0 0
        %551 = vmatpush1.bf16.msra.mxu0 0
        %552 = vmatprep.subr.bf16.mxu0 0
        %553 = vmatpush1.bf16.msra.mxu0 0
        %554 = vmatprep.subr.bf16.mxu0 0
        %555 = vmatpush1.bf16.msra.mxu0 0
        %556 = vmatprep.subr.bf16.mxu0 0
        %557 = vmatpush1.bf16.msra.mxu0 %v540
        %558 = vmatprep.subr.bf16.mxu0 0
        %559 = vmatpush2.bf16.msra.mxu0 0
        %560 = vmatprep.subr.bf16.mxu0 0
        %561 = vmatpush2.bf16.msra.mxu0 0
        %562 = vmatprep.subr.bf16.mxu0 0
        %563 = vmatpush2.bf16.msra.mxu0 0
        %564 = vmatprep.subr.bf16.mxu0 0
        %565 = vmatpush2.bf16.msra.mxu0 0
        %566 = vmatprep.subr.bf16.mxu0 0
        %567 = vmatpush2.bf16.msra.mxu0 0
        %568 = vmatprep.subr.bf16.mxu0 0
        %569 = vmatpush2.bf16.msra.mxu0 0
        %570 = vmatprep.subr.bf16.mxu0 0
        %571 = vmatpush2.bf16.msra.mxu0 0
        %572 = vmatprep.subr.bf16.mxu0 0
        %573 = vmatpush2.bf16.msra.mxu0 0
        %574 = vmatprep.mubr.bf16.mxu0 0
        %575 = vmatmul.mubr.bf16.gmra.mxu0 %v537
        %v576 = vpop.f32.mrf.mxu0
        %v577 = vadd.f32 %v530, %v576
        %v578 = vpop.f32.mrf.mxu0
        %v579 = vpop.f32.mrf.mxu0
        %v580 = vadd.f32 %v533, %v579
        %v581 = vpop.f32.mrf.mxu0
        %582 = vdwg.mxu0
        %v583 = vpack.c.bf16 %v481, %v480
        %s584 = scalar_lea.vmem %s1, 4
        %v585 = vld [vmem:[%s584] sm:$0x3]
        %v587 = vsel %vm487, %v583, 0
        %v590 = vsel %vm491, %v585, 0
        %592 = vmatprep.subr.bf16.mxu0 0
        %593 = vmatpush1.bf16.msra.mxu0 0
        %594 = vmatprep.subr.bf16.mxu0 0
        %595 = vmatpush1.bf16.msra.mxu0 0
        %596 = vmatprep.subr.bf16.mxu0 0
        %597 = vmatpush1.bf16.msra.mxu0 0
        %598 = vmatprep.subr.bf16.mxu0 0
        %599 = vmatpush1.bf16.msra.mxu0 0
        %600 = vmatprep.subr.bf16.mxu0 0
        %601 = vmatpush1.bf16.msra.mxu0 0
        %602 = vmatprep.subr.bf16.mxu0 0
        %603 = vmatpush1.bf16.msra.mxu0 0
        %604 = vmatprep.subr.bf16.mxu0 0
        %605 = vmatpush1.bf16.msra.mxu0 0
        %606 = vmatprep.subr.bf16.mxu0 0
        %607 = vmatpush1.bf16.msra.mxu0 %v590
        %608 = vmatprep.subr.bf16.mxu0 0
        %609 = vmatpush2.bf16.msra.mxu0 0
        %610 = vmatprep.subr.bf16.mxu0 0
        %611 = vmatpush2.bf16.msra.mxu0 0
        %612 = vmatprep.subr.bf16.mxu0 0
        %613 = vmatpush2.bf16.msra.mxu0 0
        %614 = vmatprep.subr.bf16.mxu0 0
        %615 = vmatpush2.bf16.msra.mxu0 0
        %616 = vmatprep.subr.bf16.mxu0 0
        %617 = vmatpush2.bf16.msra.mxu0 0
        %618 = vmatprep.subr.bf16.mxu0 0
        %619 = vmatpush2.bf16.msra.mxu0 0
        %620 = vmatprep.subr.bf16.mxu0 0
        %621 = vmatpush2.bf16.msra.mxu0 0
        %622 = vmatprep.subr.bf16.mxu0 0
        %623 = vmatpush2.bf16.msra.mxu0 0
        %624 = vmatprep.mubr.bf16.mxu0 0
        %625 = vmatmul.mubr.bf16.gmra.mxu0 %v587
        %v626 = vpop.f32.mrf.mxu0
        %v627 = vadd.f32 0.0, %v626
        %v628 = vpop.f32.mrf.mxu0
        %v629 = vpop.f32.mrf.mxu0
        %v630 = vadd.f32 0.0, %v629
        %v631 = vpop.f32.mrf.mxu0
        %632 = vdwg.mxu0
        %v633 = vadd.f32 %v577, %v627
        %v634 = vadd.f32 %v580, %v630
        %v635 = vadd.f32 %v633, %v419
        %v636 = vadd.f32 %v634, %v419
        %v637 = vmax.f32 %v635, 0.0
        %v638 = vmax.f32 %v636, 0.0
        %v639 = vpack.c.bf16 %v638, %v637
        %v640 = vld [vmem:[#allocation2] sm:$0xf]
        %v641 = vld [vmem:[#allocation2 + $0x4] sm:$0xf]
        %v642 = vld [vmem:[#allocation2 + $0x8] sm:$0xf]
        %v643 = vld [vmem:[#allocation2 + $0xc] sm:$0xf]
        %v644 = vld [vmem:[#allocation2 + $0x10] sm:$0xf]
        %v645 = vld [vmem:[#allocation2 + $0x14] sm:$0xf]
        %v646 = vld [vmem:[#allocation2 + $0x18] sm:$0xf]
        %v647 = vld [vmem:[#allocation2 + $0x1c] sm:$0xf]
        %v648 = vld [vmem:[#allocation2 + $0x20] sm:$0xf]
        %v649 = vld [vmem:[#allocation2 + $0x24] sm:$0xf]
        %v650 = vld [vmem:[#allocation2 + $0x28] sm:$0xf]
        %v651 = vld [vmem:[#allocation2 + $0x2c] sm:$0xf]
        %v652 = vld [vmem:[#allocation2 + $0x30] sm:$0xf]
        %v653 = vld [vmem:[#allocation2 + $0x34] sm:$0xf]
        %v654 = vld [vmem:[#allocation2 + $0x38] sm:$0xf]
        %v655 = vld [vmem:[#allocation2 + $0x3c] sm:$0xf]
        %v672 = vunpack.c.l.b16 %v640
        %v673 = vunpack.c.l.b16 %v641
        %v674 = vunpack.c.l.b16 %v642
        %v675 = vunpack.c.l.b16 %v643
        %v676 = vunpack.c.l.b16 %v644
        %v677 = vunpack.c.l.b16 %v645
        %v678 = vunpack.c.l.b16 %v646
        %v679 = vunpack.c.l.b16 %v647
        %v680 = vunpack.c.l.b16 %v648
        %v681 = vunpack.c.l.b16 %v649
        %v682 = vunpack.c.l.b16 %v650
        %v683 = vunpack.c.l.b16 %v651
        %v684 = vunpack.c.l.b16 %v652
        %v685 = vunpack.c.l.b16 %v653
        %v686 = vunpack.c.l.b16 %v654
        %v687 = vunpack.c.l.b16 %v655
        %v688 = vpack.c.b16 %v673, %v672
        %v689 = vpack.c.b16 %v675, %v674
        %v690 = vpack.c.b16 %v677, %v676
        %v691 = vpack.c.b16 %v679, %v678
        %v692 = vpack.c.b16 %v681, %v680
        %v693 = vpack.c.b16 %v683, %v682
        %v694 = vpack.c.b16 %v685, %v684
        %v695 = vpack.c.b16 %v687, %v686
        %704 = vmatprep.subr.bf16.mxu0 0
        %705 = vmatpush1.bf16.msra.mxu0 %v695
        %706 = vmatprep.subr.bf16.mxu0 0
        %707 = vmatpush1.bf16.msra.mxu0 %v694
        %708 = vmatprep.subr.bf16.mxu0 0
        %709 = vmatpush1.bf16.msra.mxu0 %v693
        %710 = vmatprep.subr.bf16.mxu0 0
        %711 = vmatpush1.bf16.msra.mxu0 %v692
        %712 = vmatprep.subr.bf16.mxu0 0
        %713 = vmatpush1.bf16.msra.mxu0 %v691
        %714 = vmatprep.subr.bf16.mxu0 0
        %715 = vmatpush1.bf16.msra.mxu0 %v690
        %716 = vmatprep.subr.bf16.mxu0 0
        %717 = vmatpush1.bf16.msra.mxu0 %v689
        %718 = vmatprep.subr.bf16.mxu0 0
        %719 = vmatpush1.bf16.msra.mxu0 %v688
        %720 = vmatprep.subr.bf16.mxu0 0
        %721 = vmatpush2.bf16.msra.mxu0 0
        %722 = vmatprep.subr.bf16.mxu0 0
        %723 = vmatpush2.bf16.msra.mxu0 0
        %724 = vmatprep.subr.bf16.mxu0 0
        %725 = vmatpush2.bf16.msra.mxu0 0
        %726 = vmatprep.subr.bf16.mxu0 0
        %727 = vmatpush2.bf16.msra.mxu0 0
        %728 = vmatprep.subr.bf16.mxu0 0
        %729 = vmatpush2.bf16.msra.mxu0 0
        %730 = vmatprep.subr.bf16.mxu0 0
        %731 = vmatpush2.bf16.msra.mxu0 0
        %732 = vmatprep.subr.bf16.mxu0 0
        %733 = vmatpush2.bf16.msra.mxu0 0
        %734 = vmatprep.subr.bf16.mxu0 0
        %735 = vmatpush2.bf16.msra.mxu0 0
        %736 = vmatprep.mubr.bf16.mxu0 0
        %737 = vmatmul.mubr.bf16.gmra.mxu0 %v639
        %v738 = vpop.f32.mrf.mxu0
        %v739 = vadd.f32 %v420, %v738
        %v740 = vpop.f32.mrf.mxu0
        %v741 = vpop.f32.mrf.mxu0
        %v742 = vadd.f32 %v420, %v741
        %v743 = vpop.f32.mrf.mxu0
        %744 = vdwg.mxu0
        %v745 = vpack.c.bf16 %v742, %v739
        %v746 = vld [vmem:[#allocation5] sm:$0xff]
        %v747 = vld [vmem:[#allocation5 + $0x8] sm:$0xf]
        %v748 = vld [vmem:[#allocation5 + $0xc] sm:$0xff]
        %v749 = vld [vmem:[#allocation5 + $0x14] sm:$0xf]
        %v750 = vld [vmem:[#allocation5 + $0x18] sm:$0xff]
        %v751 = vld [vmem:[#allocation5 + $0x20] sm:$0xf]
        %v752 = vld [vmem:[#allocation5 + $0x24] sm:$0xff]
        %v753 = vld [vmem:[#allocation5 + $0x2c] sm:$0xf]
        %v754 = vld [vmem:[#allocation5 + $0x30] sm:$0xff]
        %v755 = vld [vmem:[#allocation5 + $0x38] sm:$0xf]
        %v756 = vld [vmem:[#allocation5 + $0x3c] sm:$0xff]
        %v757 = vld [vmem:[#allocation5 + $0x44] sm:$0xf]
        %v758 = vld [vmem:[#allocation5 + $0x48] sm:$0xff]
        %v759 = vld [vmem:[#allocation5 + $0x50] sm:$0xf]
        %v760 = vld [vmem:[#allocation5 + $0x54] sm:$0xff]
        %v761 = vld [vmem:[#allocation5 + $0x5c] sm:$0xf]
        %v762 = vld [vmem:[#allocation5 + $0x60] sm:$0xff]
        %v763 = vld [vmem:[#allocation5 + $0x68] sm:$0xf]
        %v764 = vld [vmem:[#allocation5 + $0x6c] sm:$0xff]
        %v765 = vld [vmem:[#allocation5 + $0x74] sm:$0xf]
        %v766 = vld [vmem:[#allocation5 + $0x78] sm:$0xff]
        %v767 = vld [vmem:[#allocation5 + $0x80] sm:$0xf]
        %v768 = vld [vmem:[#allocation5 + $0x84] sm:$0xff]
        %v769 = vld [vmem:[#allocation5 + $0x8c] sm:$0xf]
        %v770 = vld [vmem:[#allocation5 + $0x90] sm:$0xff]
        %v771 = vld [vmem:[#allocation5 + $0x98] sm:$0xf]
        %v772 = vld [vmem:[#allocation5 + $0x9c] sm:$0xff]
        %v773 = vld [vmem:[#allocation5 + $0xa4] sm:$0xf]
        %v774 = vld [vmem:[#allocation5 + $0xa8] sm:$0xff]
        %v775 = vld [vmem:[#allocation5 + $0xb0] sm:$0xf]
        %v776 = vld [vmem:[#allocation5 + $0xb4] sm:$0xff]
        %v777 = vld [vmem:[#allocation5 + $0xbc] sm:$0xf]
        %v779 = vlaneseq
        %v780 = vshrl.u32 %v779, 7
        %v781 = vsub.s32 0, %v780
        %v782 = vrot.slane %v422, %v781
        %v783 = vlaneseq
        %v784 = vshrl.u32 %v783, 7
        %v785 = vsub.s32 1, %v784
        %v786 = vrot.slane %v422, %v785
        %v787 = vlaneseq
        %v788 = vshrl.u32 %v787, 7
        %v789 = vsub.s32 2, %v788
        %v790 = vrot.slane %v422, %v789
        %v826 = vunpack.c.l.b16 %v746
        %v827 = vunpack.c.h.b16 %v746
        %v828 = vunpack.c.l.b16 %v747
        %v829 = vunpack.c.l.b16 %v748
        %v830 = vunpack.c.h.b16 %v748
        %v831 = vunpack.c.l.b16 %v749
        %v832 = vunpack.c.l.b16 %v750
        %v833 = vunpack.c.h.b16 %v750
        %v834 = vunpack.c.l.b16 %v751
        %v835 = vunpack.c.l.b16 %v752
        %v836 = vunpack.c.h.b16 %v752
        %v837 = vunpack.c.l.b16 %v753
        %v838 = vunpack.c.l.b16 %v754
        %v839 = vunpack.c.h.b16 %v754
        %v840 = vunpack.c.l.b16 %v755
        %v841 = vunpack.c.l.b16 %v756
        %v842 = vunpack.c.h.b16 %v756
        %v843 = vunpack.c.l.b16 %v757
        %v844 = vunpack.c.l.b16 %v758
        %v845 = vunpack.c.h.b16 %v758
        %v846 = vunpack.c.l.b16 %v759
        %v847 = vunpack.c.l.b16 %v760
        %v848 = vunpack.c.h.b16 %v760
        %v849 = vunpack.c.l.b16 %v761
        %v850 = vunpack.c.l.b16 %v762
        %v851 = vunpack.c.h.b16 %v762
        %v852 = vunpack.c.l.b16 %v763
        %v853 = vunpack.c.l.b16 %v764
        %v854 = vunpack.c.h.b16 %v764
        %v855 = vunpack.c.l.b16 %v765
        %v856 = vunpack.c.l.b16 %v766
        %v857 = vunpack.c.h.b16 %v766
        %v858 = vunpack.c.l.b16 %v767
        %v859 = vunpack.c.l.b16 %v768
        %v860 = vunpack.c.h.b16 %v768
        %v861 = vunpack.c.l.b16 %v769
        %v862 = vunpack.c.l.b16 %v770
        %v863 = vunpack.c.h.b16 %v770
        %v864 = vunpack.c.l.b16 %v771
        %v865 = vunpack.c.l.b16 %v772
        %v866 = vunpack.c.h.b16 %v772
        %v867 = vunpack.c.l.b16 %v773
        %v868 = vunpack.c.l.b16 %v774
        %v869 = vunpack.c.h.b16 %v774
        %v870 = vunpack.c.l.b16 %v775
        %v871 = vunpack.c.l.b16 %v776
        %v872 = vunpack.c.h.b16 %v776
        %v873 = vunpack.c.l.b16 %v777
        %v874 = vpack.c.b16 %v829, %v826
        %v875 = vpack.c.b16 %v830, %v827
        %v876 = vpack.c.b16 %v831, %v828
        %v877 = vpack.c.b16 %v835, %v832
        %v878 = vpack.c.b16 %v836, %v833
        %v879 = vpack.c.b16 %v837, %v834
        %v880 = vpack.c.b16 %v841, %v838
        %v881 = vpack.c.b16 %v842, %v839
        %v882 = vpack.c.b16 %v843, %v840
        %v883 = vpack.c.b16 %v847, %v844
        %v884 = vpack.c.b16 %v848, %v845
        %v885 = vpack.c.b16 %v849, %v846
        %v886 = vpack.c.b16 %v853, %v850
        %v887 = vpack.c.b16 %v854, %v851
        %v888 = vpack.c.b16 %v855, %v852
        %v889 = vpack.c.b16 %v859, %v856
        %v890 = vpack.c.b16 %v860, %v857
        %v891 = vpack.c.b16 %v861, %v858
        %v892 = vpack.c.b16 %v865, %v862
        %v893 = vpack.c.b16 %v866, %v863
        %v894 = vpack.c.b16 %v867, %v864
        %v895 = vpack.c.b16 %v871, %v868
        %v896 = vpack.c.b16 %v872, %v869
        %v897 = vpack.c.b16 %v873, %v870
        %922 = vmatprep.subr.bf16.mxu0 %v896
        %923 = vmatpush1.bf16.msra.mxu0 %v895
        %924 = vmatprep.subr.bf16.mxu0 %v893
        %925 = vmatpush1.bf16.msra.mxu0 %v892
        %926 = vmatprep.subr.bf16.mxu0 %v890
        %927 = vmatpush1.bf16.msra.mxu0 %v889
        %928 = vmatprep.subr.bf16.mxu0 %v887
        %929 = vmatpush1.bf16.msra.mxu0 %v886
        %930 = vmatprep.subr.bf16.mxu0 %v884
        %931 = vmatpush1.bf16.msra.mxu0 %v883
        %932 = vmatprep.subr.bf16.mxu0 %v881
        %933 = vmatpush1.bf16.msra.mxu0 %v880
        %934 = vmatprep.subr.bf16.mxu0 %v878
        %935 = vmatpush1.bf16.msra.mxu0 %v877
        %936 = vmatprep.subr.bf16.mxu0 %v875
        %937 = vmatpush1.bf16.msra.mxu0 %v874
        %938 = vmatprep.subr.bf16.mxu0 0
        %939 = vmatpush2.bf16.msra.mxu0 0
        %940 = vmatprep.subr.bf16.mxu0 0
        %941 = vmatpush2.bf16.msra.mxu0 0
        %942 = vmatprep.subr.bf16.mxu0 0
        %943 = vmatpush2.bf16.msra.mxu0 0
        %944 = vmatprep.subr.bf16.mxu0 0
        %945 = vmatpush2.bf16.msra.mxu0 0
        %946 = vmatprep.subr.bf16.mxu0 0
        %947 = vmatpush2.bf16.msra.mxu0 0
        %948 = vmatprep.subr.bf16.mxu0 0
        %949 = vmatpush2.bf16.msra.mxu0 0
        %950 = vmatprep.subr.bf16.mxu0 0
        %951 = vmatpush2.bf16.msra.mxu0 0
        %952 = vmatprep.subr.bf16.mxu0 0
        %953 = vmatpush2.bf16.msra.mxu0 0
        %954 = vmatprep.mubr.bf16.mxu0 0
        %955 = vmatmul.mubr.bf16.gmra.mxu0 %v745
        %v956 = vpop.f32.mrf.mxu0
        %v957 = vadd.f32 %v782, %v956
        %v958 = vpop.f32.mrf.mxu0
        %v959 = vadd.f32 %v786, %v958
        %v960 = vpop.f32.mrf.mxu0
        %v961 = vadd.f32 %v782, %v960
        %v962 = vpop.f32.mrf.mxu0
        %v963 = vadd.f32 %v786, %v962
        %964 = vdwg.mxu0
        %965 = vmatprep.subr.bf16.mxu0 0
        %966 = vmatpush1.bf16.msra.mxu0 %v897
        %967 = vmatprep.subr.bf16.mxu0 0
        %968 = vmatpush1.bf16.msra.mxu0 %v894
        %969 = vmatprep.subr.bf16.mxu0 0
        %970 = vmatpush1.bf16.msra.mxu0 %v891
        %971 = vmatprep.subr.bf16.mxu0 0
        %972 = vmatpush1.bf16.msra.mxu0 %v888
        %973 = vmatprep.subr.bf16.mxu0 0
        %974 = vmatpush1.bf16.msra.mxu0 %v885
        %975 = vmatprep.subr.bf16.mxu0 0
        %976 = vmatpush1.bf16.msra.mxu0 %v882
        %977 = vmatprep.subr.bf16.mxu0 0
        %978 = vmatpush1.bf16.msra.mxu0 %v879
        %979 = vmatprep.subr.bf16.mxu0 0
        %980 = vmatpush1.bf16.msra.mxu0 %v876
        %981 = vmatprep.subr.bf16.mxu0 0
        %982 = vmatpush2.bf16.msra.mxu0 0
        %983 = vmatprep.subr.bf16.mxu0 0
        %984 = vmatpush2.bf16.msra.mxu0 0
        %985 = vmatprep.subr.bf16.mxu0 0
        %986 = vmatpush2.bf16.msra.mxu0 0
        %987 = vmatprep.subr.bf16.mxu0 0
        %988 = vmatpush2.bf16.msra.mxu0 0
        %989 = vmatprep.subr.bf16.mxu0 0
        %990 = vmatpush2.bf16.msra.mxu0 0
        %991 = vmatprep.subr.bf16.mxu0 0
        %992 = vmatpush2.bf16.msra.mxu0 0
        %993 = vmatprep.subr.bf16.mxu0 0
        %994 = vmatpush2.bf16.msra.mxu0 0
        %995 = vmatprep.subr.bf16.mxu0 0
        %996 = vmatpush2.bf16.msra.mxu0 0
        %997 = vmatprep.mubr.bf16.mxu0 0
        %998 = vmatmul.mubr.bf16.gmra.mxu0 %v745
        %v999 = vpop.f32.mrf.mxu0
        %v1000 = vadd.f32 %v790, %v999
        %v1001 = vpop.f32.mrf.mxu0
        %v1002 = vpop.f32.mrf.mxu0
        %v1003 = vadd.f32 %v790, %v1002
        %v1004 = vpop.f32.mrf.mxu0
        %1005 = vdwg.mxu0
        %v1006 = vpack.c.bf16 %v961, %v957
        %v1007 = vpack.c.bf16 %v963, %v959
        %1008 = vmatprep.subr.bf16.mxu0 0
        %1009 = vmatpush1.bf16.xpose.msra.mxu0 0
        %1010 = vmatprep.subr.bf16.mxu0 0
        %1011 = vmatpush1.bf16.xpose.msra.mxu0 0
        %1012 = vmatprep.subr.bf16.mxu0 0
        %1013 = vmatpush1.bf16.xpose.msra.mxu0 0
        %1014 = vmatprep.subr.bf16.mxu0 0
        %1015 = vmatpush1.bf16.xpose.msra.mxu0 0
        %1016 = vmatprep.subr.bf16.mxu0 0
        %1017 = vmatpush1.bf16.xpose.msra.mxu0 0
        %1018 = vmatprep.subr.bf16.mxu0 0
        %1019 = vmatpush1.bf16.xpose.msra.mxu0 0
        %1020 = vmatprep.subr.bf16.mxu0 0
        %1021 = vmatpush1.bf16.xpose.msra.mxu0 0
        %1022 = vmatprep.subr.bf16.mxu0 0
        %1023 = vmatpush1.bf16.xpose.msra.mxu0 %v1007
        %1024 = vmatprep.subr.bf16.mxu0 0
        %1025 = vmatpush2.bf16.xpose.msra.mxu0 0
        %1026 = vmatprep.subr.bf16.mxu0 0
        %1027 = vmatpush2.bf16.xpose.msra.mxu0 0
        %1028 = vmatprep.subr.bf16.mxu0 0
        %1029 = vmatpush2.bf16.xpose.msra.mxu0 0
        %1030 = vmatprep.subr.bf16.mxu0 0
        %1031 = vmatpush2.bf16.xpose.msra.mxu0 0
        %1032 = vmatprep.subr.bf16.mxu0 0
        %1033 = vmatpush2.bf16.xpose.msra.mxu0 0
        %1034 = vmatprep.subr.bf16.mxu0 0
        %1035 = vmatpush2.bf16.xpose.msra.mxu0 0
        %1036 = vmatprep.subr.bf16.mxu0 0
        %1037 = vmatpush2.bf16.xpose.msra.mxu0 0
        %1038 = vmatprep.subr.bf16.mxu0 0
        %1039 = vmatpush2.bf16.xpose.msra.mxu0 0
        %1040 = vmatprep.mubr.bf16.mxu0 0
        %1041 = vmatmul.mubr.bf16.gmra.mxu0 %v1006
        %v1042 = vpop.f32.mrf.mxu0
        %v1043 = vadd.f32 0.0, %v1042
        %v1044 = vpop.f32.mrf.mxu0
        %v1045 = vpop.f32.mrf.mxu0
        %v1046 = vadd.f32 0.0, %v1045
        %v1047 = vpop.f32.mrf.mxu0
        %1048 = vdwg.mxu0
        %vm1049 = vcmask 130048
        %v1050 = vsel %vm1049, %v1043, -inf
        %1051 = vmax.xlane.f32.xlu0 %v1050
        %v1052 = vpop.xlane.xlu0 %1051
        %v1053 = vsel %vm1049, %v1046, -inf
        %1054 = vmax.xlane.f32.xlu0 %v1053
        %v1055 = vpop.xlane.xlu0 %1054
        %v1056 = vsub.f32 %v1043, %v1052
        %v1057 = vsub.f32 %v1046, %v1055
        %v1058 = vmul.f32 %v1056, 1.442695
        %v1059 = vpow.pop %v1058
        %v1060 = vmul.f32 %v1057, 1.442695
        %v1061 = vpow.pop %v1060
        %v1062 = vsel %vm1049, %v1059, 0.0
        %1063 = vadd.xlane.f32.xlu0 %v1062
        %v1064 = vpop.xlane.xlu0 %1063
        %v1065 = vsel %vm1049, %v1061, 0.0
        %1066 = vadd.xlane.f32.xlu0 %v1065
        %v1067 = vpop.xlane.xlu0 %1066
        %v1068 = vrcp.pop %v1064
        %v1069 = vrcp.pop %v1067
        %v1070 = vmul.f32 %v1059, %v1068
        %v1071 = vmul.f32 %v1061, %v1069
        %v1072 = vpack.c.bf16 %v1071, %v1070
        %v1073 = vpack.c.bf16 %v1003, %v1000
        %v1075 = vsel %vm1049, %v1072, 0
        %1077 = vmatprep.subr.bf16.mxu0 0
        %1078 = vmatpush1.bf16.msra.mxu0 0
        %1079 = vmatprep.subr.bf16.mxu0 0
        %1080 = vmatpush1.bf16.msra.mxu0 0
        %1081 = vmatprep.subr.bf16.mxu0 0
        %1082 = vmatpush1.bf16.msra.mxu0 0
        %1083 = vmatprep.subr.bf16.mxu0 0
        %1084 = vmatpush1.bf16.msra.mxu0 0
        %1085 = vmatprep.subr.bf16.mxu0 0
        %1086 = vmatpush1.bf16.msra.mxu0 0
        %1087 = vmatprep.subr.bf16.mxu0 0
        %1088 = vmatpush1.bf16.msra.mxu0 0
        %1089 = vmatprep.subr.bf16.mxu0 0
        %1090 = vmatpush1.bf16.msra.mxu0 0
        %1091 = vmatprep.subr.bf16.mxu0 0
        %1092 = vmatpush1.bf16.msra.mxu0 %v1073
        %1093 = vmatprep.subr.bf16.mxu0 0
        %1094 = vmatpush2.bf16.msra.mxu0 0
        %1095 = vmatprep.subr.bf16.mxu0 0
        %1096 = vmatpush2.bf16.msra.mxu0 0
        %1097 = vmatprep.subr.bf16.mxu0 0
        %1098 = vmatpush2.bf16.msra.mxu0 0
        %1099 = vmatprep.subr.bf16.mxu0 0
        %1100 = vmatpush2.bf16.msra.mxu0 0
        %1101 = vmatprep.subr.bf16.mxu0 0
        %1102 = vmatpush2.bf16.msra.mxu0 0
        %1103 = vmatprep.subr.bf16.mxu0 0
        %1104 = vmatpush2.bf16.msra.mxu0 0
        %1105 = vmatprep.subr.bf16.mxu0 0
        %1106 = vmatpush2.bf16.msra.mxu0 0
        %1107 = vmatprep.subr.bf16.mxu0 0
        %1108 = vmatpush2.bf16.msra.mxu0 0
        %1109 = vmatprep.mubr.bf16.mxu0 0
        %1110 = vmatmul.mubr.bf16.gmra.mxu0 %v1075
        %v1111 = vpop.f32.mrf.mxu0
        %v1112 = vadd.f32 0.0, %v1111
        %v1113 = vpop.f32.mrf.mxu0
        %v1114 = vpop.f32.mrf.mxu0
        %v1115 = vadd.f32 0.0, %v1114
        %v1116 = vpop.f32.mrf.mxu0
        %1117 = vdwg.mxu0
        %v1118 = vpack.c.bf16 %v1115, %v1112
        %v1119 = vld [vmem:[#allocation7] sm:$0xf]
        %v1120 = vld [vmem:[#allocation7 + $0x4] sm:$0xf]
        %v1121 = vld [vmem:[#allocation7 + $0x8] sm:$0xf]
        %v1122 = vld [vmem:[#allocation7 + $0xc] sm:$0xf]
        %v1123 = vld [vmem:[#allocation7 + $0x10] sm:$0xf]
        %v1124 = vld [vmem:[#allocation7 + $0x14] sm:$0xf]
        %v1125 = vld [vmem:[#allocation7 + $0x18] sm:$0xf]
        %v1126 = vld [vmem:[#allocation7 + $0x1c] sm:$0xf]
        %v1127 = vld [vmem:[#allocation7 + $0x20] sm:$0xf]
        %v1128 = vld [vmem:[#allocation7 + $0x24] sm:$0xf]
        %v1129 = vld [vmem:[#allocation7 + $0x28] sm:$0xf]
        %v1130 = vld [vmem:[#allocation7 + $0x2c] sm:$0xf]
        %v1131 = vld [vmem:[#allocation7 + $0x30] sm:$0xf]
        %v1132 = vld [vmem:[#allocation7 + $0x34] sm:$0xf]
        %v1133 = vld [vmem:[#allocation7 + $0x38] sm:$0xf]
        %v1134 = vld [vmem:[#allocation7 + $0x3c] sm:$0xf]
        %v1151 = vunpack.c.l.b16 %v1119
        %v1152 = vunpack.c.l.b16 %v1120
        %v1153 = vunpack.c.l.b16 %v1121
        %v1154 = vunpack.c.l.b16 %v1122
        %v1155 = vunpack.c.l.b16 %v1123
        %v1156 = vunpack.c.l.b16 %v1124
        %v1157 = vunpack.c.l.b16 %v1125
        %v1158 = vunpack.c.l.b16 %v1126
        %v1159 = vunpack.c.l.b16 %v1127
        %v1160 = vunpack.c.l.b16 %v1128
        %v1161 = vunpack.c.l.b16 %v1129
        %v1162 = vunpack.c.l.b16 %v1130
        %v1163 = vunpack.c.l.b16 %v1131
        %v1164 = vunpack.c.l.b16 %v1132
        %v1165 = vunpack.c.l.b16 %v1133
        %v1166 = vunpack.c.l.b16 %v1134
        %v1167 = vpack.c.b16 %v1152, %v1151
        %v1168 = vpack.c.b16 %v1154, %v1153
        %v1169 = vpack.c.b16 %v1156, %v1155
        %v1170 = vpack.c.b16 %v1158, %v1157
        %v1171 = vpack.c.b16 %v1160, %v1159
        %v1172 = vpack.c.b16 %v1162, %v1161
        %v1173 = vpack.c.b16 %v1164, %v1163
        %v1174 = vpack.c.b16 %v1166, %v1165
        %1183 = vmatprep.subr.bf16.mxu0 0
        %1184 = vmatpush1.bf16.msra.mxu0 %v1174
        %1185 = vmatprep.subr.bf16.mxu0 0
        %1186 = vmatpush1.bf16.msra.mxu0 %v1173
        %1187 = vmatprep.subr.bf16.mxu0 0
        %1188 = vmatpush1.bf16.msra.mxu0 %v1172
        %1189 = vmatprep.subr.bf16.mxu0 0
        %1190 = vmatpush1.bf16.msra.mxu0 %v1171
        %1191 = vmatprep.subr.bf16.mxu0 0
        %1192 = vmatpush1.bf16.msra.mxu0 %v1170
        %1193 = vmatprep.subr.bf16.mxu0 0
        %1194 = vmatpush1.bf16.msra.mxu0 %v1169
        %1195 = vmatprep.subr.bf16.mxu0 0
        %1196 = vmatpush1.bf16.msra.mxu0 %v1168
        %1197 = vmatprep.subr.bf16.mxu0 0
        %1198 = vmatpush1.bf16.msra.mxu0 %v1167
        %1199 = vmatprep.subr.bf16.mxu0 0
        %1200 = vmatpush2.bf16.msra.mxu0 0
        %1201 = vmatprep.subr.bf16.mxu0 0
        %1202 = vmatpush2.bf16.msra.mxu0 0
        %1203 = vmatprep.subr.bf16.mxu0 0
        %1204 = vmatpush2.bf16.msra.mxu0 0
        %1205 = vmatprep.subr.bf16.mxu0 0
        %1206 = vmatpush2.bf16.msra.mxu0 0
        %1207 = vmatprep.subr.bf16.mxu0 0
        %1208 = vmatpush2.bf16.msra.mxu0 0
        %1209 = vmatprep.subr.bf16.mxu0 0
        %1210 = vmatpush2.bf16.msra.mxu0 0
        %1211 = vmatprep.subr.bf16.mxu0 0
        %1212 = vmatpush2.bf16.msra.mxu0 0
        %1213 = vmatprep.subr.bf16.mxu0 0
        %1214 = vmatpush2.bf16.msra.mxu0 0
        %1215 = vmatprep.mubr.bf16.mxu0 0
        %1216 = vmatmul.mubr.bf16.gmra.mxu0 %v1118
        %v1217 = vpop.f32.mrf.mxu0
        %v1218 = vadd.f32 0.0, %v1217
        %v1219 = vpop.f32.mrf.mxu0
        %v1220 = vpop.f32.mrf.mxu0
        %v1221 = vadd.f32 0.0, %v1220
        %v1222 = vpop.f32.mrf.mxu0
        %1223 = vdwg.mxu0
        %v1224 = vadd.f32 %v739, %v1218
        %v1225 = vadd.f32 %v742, %v1221
        %v1226 = vadd.f32 %v1224, %v423
        %v1227 = vadd.f32 %v1225, %v423
        %v1228 = vpack.c.bf16 %v1227, %v1226
        %v1229 = vld [vmem:[#allocation8] sm:$0xf]
        %v1230 = vld [vmem:[#allocation8 + $0x4] sm:$0xf]
        %v1231 = vld [vmem:[#allocation8 + $0x8] sm:$0xf]
        %v1232 = vld [vmem:[#allocation8 + $0xc] sm:$0xf]
        %v1233 = vld [vmem:[#allocation8 + $0x10] sm:$0xf]
        %v1234 = vld [vmem:[#allocation8 + $0x14] sm:$0xf]
        %v1235 = vld [vmem:[#allocation8 + $0x18] sm:$0xf]
        %v1236 = vld [vmem:[#allocation8 + $0x1c] sm:$0xf]
        %v1237 = vld [vmem:[#allocation8 + $0x20] sm:$0xf]
        %v1238 = vld [vmem:[#allocation8 + $0x24] sm:$0xf]
        %v1239 = vld [vmem:[#allocation8 + $0x28] sm:$0xf]
        %v1240 = vld [vmem:[#allocation8 + $0x2c] sm:$0xf]
        %v1241 = vld [vmem:[#allocation8 + $0x30] sm:$0xf]
        %v1242 = vld [vmem:[#allocation8 + $0x34] sm:$0xf]
        %v1243 = vld [vmem:[#allocation8 + $0x38] sm:$0xf]
        %v1244 = vld [vmem:[#allocation8 + $0x3c] sm:$0xf]
        %v1261 = vunpack.c.l.b16 %v1229
        %v1262 = vunpack.c.l.b16 %v1230
        %v1263 = vunpack.c.l.b16 %v1231
        %v1264 = vunpack.c.l.b16 %v1232
        %v1265 = vunpack.c.l.b16 %v1233
        %v1266 = vunpack.c.l.b16 %v1234
        %v1267 = vunpack.c.l.b16 %v1235
        %v1268 = vunpack.c.l.b16 %v1236
        %v1269 = vunpack.c.l.b16 %v1237
        %v1270 = vunpack.c.l.b16 %v1238
        %v1271 = vunpack.c.l.b16 %v1239
        %v1272 = vunpack.c.l.b16 %v1240
        %v1273 = vunpack.c.l.b16 %v1241
        %v1274 = vunpack.c.l.b16 %v1242
        %v1275 = vunpack.c.l.b16 %v1243
        %v1276 = vunpack.c.l.b16 %v1244
        %v1277 = vpack.c.b16 %v1262, %v1261
        %v1278 = vpack.c.b16 %v1264, %v1263
        %v1279 = vpack.c.b16 %v1266, %v1265
        %v1280 = vpack.c.b16 %v1268, %v1267
        %v1281 = vpack.c.b16 %v1270, %v1269
        %v1282 = vpack.c.b16 %v1272, %v1271
        %v1283 = vpack.c.b16 %v1274, %v1273
        %v1284 = vpack.c.b16 %v1276, %v1275
        %1293 = vmatprep.subr.bf16.mxu0 0
        %1294 = vmatpush1.bf16.msra.mxu0 %v1284
        %1295 = vmatprep.subr.bf16.mxu0 0
        %1296 = vmatpush1.bf16.msra.mxu0 %v1283
        %1297 = vmatprep.subr.bf16.mxu0 0
        %1298 = vmatpush1.bf16.msra.mxu0 %v1282
        %1299 = vmatprep.subr.bf16.mxu0 0
        %1300 = vmatpush1.bf16.msra.mxu0 %v1281
        %1301 = vmatprep.subr.bf16.mxu0 0
        %1302 = vmatpush1.bf16.msra.mxu0 %v1280
        %1303 = vmatprep.subr.bf16.mxu0 0
        %1304 = vmatpush1.bf16.msra.mxu0 %v1279
        %1305 = vmatprep.subr.bf16.mxu0 0
        %1306 = vmatpush1.bf16.msra.mxu0 %v1278
        %1307 = vmatprep.subr.bf16.mxu0 0
        %1308 = vmatpush1.bf16.msra.mxu0 %v1277
        %1309 = vmatprep.subr.bf16.mxu0 0
        %1310 = vmatpush2.bf16.msra.mxu0 0
        %1311 = vmatprep.subr.bf16.mxu0 0
        %1312 = vmatpush2.bf16.msra.mxu0 0
        %1313 = vmatprep.subr.bf16.mxu0 0
        %1314 = vmatpush2.bf16.msra.mxu0 0
        %1315 = vmatprep.subr.bf16.mxu0 0
        %1316 = vmatpush2.bf16.msra.mxu0 0
        %1317 = vmatprep.subr.bf16.mxu0 0
        %1318 = vmatpush2.bf16.msra.mxu0 0
        %1319 = vmatprep.subr.bf16.mxu0 0
        %1320 = vmatpush2.bf16.msra.mxu0 0
        %1321 = vmatprep.subr.bf16.mxu0 0
        %1322 = vmatpush2.bf16.msra.mxu0 0
        %1323 = vmatprep.subr.bf16.mxu0 0
        %1324 = vmatpush2.bf16.msra.mxu0 0
        %1325 = vmatprep.mubr.bf16.mxu0 0
        %1326 = vmatmul.mubr.bf16.gmra.mxu0 %v1228
        %v1327 = vpop.f32.mrf.mxu0
        %v1328 = vadd.f32 %v424, %v1327
        %v1329 = vpop.f32.mrf.mxu0
        %v1330 = vpop.f32.mrf.mxu0
        %v1331 = vadd.f32 %v424, %v1330
        %v1332 = vpop.f32.mrf.mxu0
        %1333 = vdwg.mxu0
        %v1334 = vmax.f32 %v1328, 0.0
        %v1335 = vmax.f32 %v1331, 0.0
        %v1336 = vpack.c.bf16 %v1335, %v1334
        %v1337 = vld [vmem:[#allocation10] sm:$0xf]
        %v1338 = vld [vmem:[#allocation10 + $0x4] sm:$0xf]
        %v1339 = vld [vmem:[#allocation10 + $0x8] sm:$0xf]
        %v1340 = vld [vmem:[#allocation10 + $0xc] sm:$0xf]
        %v1341 = vld [vmem:[#allocation10 + $0x10] sm:$0xf]
        %v1342 = vld [vmem:[#allocation10 + $0x14] sm:$0xf]
        %v1343 = vld [vmem:[#allocation10 + $0x18] sm:$0xf]
        %v1344 = vld [vmem:[#allocation10 + $0x1c] sm:$0xf]
        %v1345 = vld [vmem:[#allocation10 + $0x20] sm:$0xf]
        %v1346 = vld [vmem:[#allocation10 + $0x24] sm:$0xf]
        %v1347 = vld [vmem:[#allocation10 + $0x28] sm:$0xf]
        %v1348 = vld [vmem:[#allocation10 + $0x2c] sm:$0xf]
        %v1349 = vld [vmem:[#allocation10 + $0x30] sm:$0xf]
        %v1350 = vld [vmem:[#allocation10 + $0x34] sm:$0xf]
        %v1351 = vld [vmem:[#allocation10 + $0x38] sm:$0xf]
        %v1352 = vld [vmem:[#allocation10 + $0x3c] sm:$0xf]
        %v1369 = vunpack.c.l.b16 %v1337
        %v1370 = vunpack.c.l.b16 %v1338
        %v1371 = vunpack.c.l.b16 %v1339
        %v1372 = vunpack.c.l.b16 %v1340
        %v1373 = vunpack.c.l.b16 %v1341
        %v1374 = vunpack.c.l.b16 %v1342
        %v1375 = vunpack.c.l.b16 %v1343
        %v1376 = vunpack.c.l.b16 %v1344
        %v1377 = vunpack.c.l.b16 %v1345
        %v1378 = vunpack.c.l.b16 %v1346
        %v1379 = vunpack.c.l.b16 %v1347
        %v1380 = vunpack.c.l.b16 %v1348
        %v1381 = vunpack.c.l.b16 %v1349
        %v1382 = vunpack.c.l.b16 %v1350
        %v1383 = vunpack.c.l.b16 %v1351
        %v1384 = vunpack.c.l.b16 %v1352
        %v1385 = vpack.c.b16 %v1370, %v1369
        %v1386 = vpack.c.b16 %v1372, %v1371
        %v1387 = vpack.c.b16 %v1374, %v1373
        %v1388 = vpack.c.b16 %v1376, %v1375
        %v1389 = vpack.c.b16 %v1378, %v1377
        %v1390 = vpack.c.b16 %v1380, %v1379
        %v1391 = vpack.c.b16 %v1382, %v1381
        %v1392 = vpack.c.b16 %v1384, %v1383
        %1401 = vmatprep.subr.bf16.mxu0 0
        %1402 = vmatpush1.bf16.msra.mxu0 %v1392
        %1403 = vmatprep.subr.bf16.mxu0 0
        %1404 = vmatpush1.bf16.msra.mxu0 %v1391
        %1405 = vmatprep.subr.bf16.mxu0 0
        %1406 = vmatpush1.bf16.msra.mxu0 %v1390
        %1407 = vmatprep.subr.bf16.mxu0 0
        %1408 = vmatpush1.bf16.msra.mxu0 %v1389
        %1409 = vmatprep.subr.bf16.mxu0 0
        %1410 = vmatpush1.bf16.msra.mxu0 %v1388
        %1411 = vmatprep.subr.bf16.mxu0 0
        %1412 = vmatpush1.bf16.msra.mxu0 %v1387
        %1413 = vmatprep.subr.bf16.mxu0 0
        %1414 = vmatpush1.bf16.msra.mxu0 %v1386
        %1415 = vmatprep.subr.bf16.mxu0 0
        %1416 = vmatpush1.bf16.msra.mxu0 %v1385
        %1417 = vmatprep.subr.bf16.mxu0 0
        %1418 = vmatpush2.bf16.msra.mxu0 0
        %1419 = vmatprep.subr.bf16.mxu0 0
        %1420 = vmatpush2.bf16.msra.mxu0 0
        %1421 = vmatprep.subr.bf16.mxu0 0
        %1422 = vmatpush2.bf16.msra.mxu0 0
        %1423 = vmatprep.subr.bf16.mxu0 0
        %1424 = vmatpush2.bf16.msra.mxu0 0
        %1425 = vmatprep.subr.bf16.mxu0 0
        %1426 = vmatpush2.bf16.msra.mxu0 0
        %1427 = vmatprep.subr.bf16.mxu0 0
        %1428 = vmatpush2.bf16.msra.mxu0 0
        %1429 = vmatprep.subr.bf16.mxu0 0
        %1430 = vmatpush2.bf16.msra.mxu0 0
        %1431 = vmatprep.subr.bf16.mxu0 0
        %1432 = vmatpush2.bf16.msra.mxu0 0
        %1433 = vmatprep.mubr.bf16.mxu0 0
        %1434 = vmatmul.mubr.bf16.gmra.mxu0 %v1336
        %v1435 = vpop.f32.mrf.mxu0
        %v1436 = vadd.f32 0.0, %v1435
        %v1437 = vpop.f32.mrf.mxu0
        %v1438 = vpop.f32.mrf.mxu0
        %v1439 = vadd.f32 0.0, %v1438
        %v1440 = vpop.f32.mrf.mxu0
        %1441 = vdwg.mxu0
        %v1442 = vadd.f32 %v1226, %v1436
        %v1443 = vadd.f32 %v1227, %v1439
        %v1444 = vadd.f32 %v1442, %v425
        %v1445 = vadd.f32 %v1443, %v425
        %v1446 = vadd.f32 %v1444, %v1445
        %v1447 = vrot.slane %v1446, 4
        %v1448 = vadd.f32 %v1446, %v1447
        %v1449 = vrot.slane %v1448, 2
        %v1450 = vadd.f32 %v1448, %v1449
        %v1451 = vrot.slane %v1450, 1
        %v1452 = vadd.f32 %v1450, %v1451
        %v1453 = vpack.c.bf16 %v1452, %v1452
        %v1454 = vld [vmem:[#allocation11] sm:$0xf]
        %v1455 = vld [vmem:[#allocation11 + $0x4] sm:$0xf]
        %v1456 = vld [vmem:[#allocation11 + $0x8] sm:$0xf]
        %v1457 = vld [vmem:[#allocation11 + $0xc] sm:$0xf]
        %v1458 = vld [vmem:[#allocation11 + $0x10] sm:$0xf]
        %v1459 = vld [vmem:[#allocation11 + $0x14] sm:$0xf]
        %v1460 = vld [vmem:[#allocation11 + $0x18] sm:$0xf]
        %v1461 = vld [vmem:[#allocation11 + $0x1c] sm:$0xf]
        %v1462 = vld [vmem:[#allocation11 + $0x20] sm:$0xf]
        %v1463 = vld [vmem:[#allocation11 + $0x24] sm:$0xf]
        %v1464 = vld [vmem:[#allocation11 + $0x28] sm:$0xf]
        %v1465 = vld [vmem:[#allocation11 + $0x2c] sm:$0xf]
        %v1466 = vld [vmem:[#allocation11 + $0x30] sm:$0xf]
        %v1467 = vld [vmem:[#allocation11 + $0x34] sm:$0xf]
        %v1468 = vld [vmem:[#allocation11 + $0x38] sm:$0xf]
        %v1469 = vld [vmem:[#allocation11 + $0x3c] sm:$0xf]
        %v1486 = vunpack.c.l.b16 %v1454
        %v1487 = vunpack.c.l.b16 %v1455
        %v1488 = vunpack.c.l.b16 %v1456
        %v1489 = vunpack.c.l.b16 %v1457
        %v1490 = vunpack.c.l.b16 %v1458
        %v1491 = vunpack.c.l.b16 %v1459
        %v1492 = vunpack.c.l.b16 %v1460
        %v1493 = vunpack.c.l.b16 %v1461
        %v1494 = vunpack.c.l.b16 %v1462
        %v1495 = vunpack.c.l.b16 %v1463
        %v1496 = vunpack.c.l.b16 %v1464
        %v1497 = vunpack.c.l.b16 %v1465
        %v1498 = vunpack.c.l.b16 %v1466
        %v1499 = vunpack.c.l.b16 %v1467
        %v1500 = vunpack.c.l.b16 %v1468
        %v1501 = vunpack.c.l.b16 %v1469
        %v1502 = vpack.c.b16 %v1487, %v1486
        %v1503 = vpack.c.b16 %v1489, %v1488
        %v1504 = vpack.c.b16 %v1491, %v1490
        %v1505 = vpack.c.b16 %v1493, %v1492
        %v1506 = vpack.c.b16 %v1495, %v1494
        %v1507 = vpack.c.b16 %v1497, %v1496
        %v1508 = vpack.c.b16 %v1499, %v1498
        %v1509 = vpack.c.b16 %v1501, %v1500
        %1518 = vmatprep.subr.bf16.mxu0 0
        %1519 = vmatpush1.bf16.msra.mxu0 %v1509
        %1520 = vmatprep.subr.bf16.mxu0 0
        %1521 = vmatpush1.bf16.msra.mxu0 %v1508
        %1522 = vmatprep.subr.bf16.mxu0 0
        %1523 = vmatpush1.bf16.msra.mxu0 %v1507
        %1524 = vmatprep.subr.bf16.mxu0 0
        %1525 = vmatpush1.bf16.msra.mxu0 %v1506
        %1526 = vmatprep.subr.bf16.mxu0 0
        %1527 = vmatpush1.bf16.msra.mxu0 %v1505
        %1528 = vmatprep.subr.bf16.mxu0 0
        %1529 = vmatpush1.bf16.msra.mxu0 %v1504
        %1530 = vmatprep.subr.bf16.mxu0 0
        %1531 = vmatpush1.bf16.msra.mxu0 %v1503
        %1532 = vmatprep.subr.bf16.mxu0 0
        %1533 = vmatpush1.bf16.msra.mxu0 %v1502
        %1534 = vmatprep.subr.bf16.mxu0 0
        %1535 = vmatpush2.bf16.msra.mxu0 0
        %1536 = vmatprep.subr.bf16.mxu0 0
        %1537 = vmatpush2.bf16.msra.mxu0 0
        %1538 = vmatprep.subr.bf16.mxu0 0
        %1539 = vmatpush2.bf16.msra.mxu0 0
        %1540 = vmatprep.subr.bf16.mxu0 0
        %1541 = vmatpush2.bf16.msra.mxu0 0
        %1542 = vmatprep.subr.bf16.mxu0 0
        %1543 = vmatpush2.bf16.msra.mxu0 0
        %1544 = vmatprep.subr.bf16.mxu0 0
        %1545 = vmatpush2.bf16.msra.mxu0 0
        %1546 = vmatprep.subr.bf16.mxu0 0
        %1547 = vmatpush2.bf16.msra.mxu0 0
        %1548 = vmatprep.subr.bf16.mxu0 0
        %1549 = vmatpush2.bf16.msra.mxu0 0
        %1550 = vmatprep.mubr.bf16.mxu0 0
        %1551 = vmatmul.mubr.bf16.gmra.mxu0 %v1453
        %v1552 = vpop.f32.mrf.mxu0
        %v1553 = vadd.f32 %v426, %v1552
        %v1554 = vpop.f32.mrf.mxu0
        %v1555 = vpop.f32.mrf.mxu0
        %v1556 = vpop.f32.mrf.mxu0
        %1557 = vdwg.mxu0
        %1558 = vst [vmem:[%s412] sm:$0x1] %v1553
        %s1559 = sand.u32 %s229, 1
        %s1560 = scalar_lea.sflag [#allocation4], %s1559
        %s1561 = sand.u32 %s229, 1
        %s1562 = scalar_lea.vmem [#allocation13], %s1561
        // Predicated region
        $region81: #{tpu_custom_call.1} parent=55 // pred_check
          %p1563 = pneg %p239
        $region82: #{tpu_custom_call.1} parent=55 // pred_check_branch
          %1565 = sbr.rel (%p1563) target = $region84
        $region83: #{tpu_custom_call.1} parent=55 // pred_region
          %s1567 = ssub.s32 16, 16
          %1568 = vsyncadd %s1560, %s1567
          %s1569 = smul.addr %s27, 16
          %s1570 = scalar_lea.hbm %s9, %s1569
          %s1572 = sshll.u32 %s1562, 4
          %s1573 = int_to_ptr.vmem [resolvable:$true] %s1572
          %1575 = dma.vmem_to_hbm [thread:$0]  %s1573, 16, %s1570, %s1560
        $region84: #{tpu_custom_call.1} parent=55 // pred_fallthru
          _
      $region56: #{tpu_custom_call.1} parent=5 // pred_fallthru
        _
      %p1576 = scmp.le.s32.totalorder 2, %s22
      // Predicated region
      $region85: #{tpu_custom_call.1} parent=5 // pred_check
        %p1577 = pneg %p1576
      $region86: #{tpu_custom_call.1} parent=5 // pred_check_branch
        %1579 = sbr.rel (%p1577) target = $region88
      $region87: #{tpu_custom_call.1} parent=5 // pred_region
        %s1580 = ssub.s32 %s22, 2
        // Predicated region
        $region89: #{tpu_custom_call.1} parent=87 // pred_check
          %p1581 = pneg %p245
        $region90: #{tpu_custom_call.1} parent=87 // pred_check_branch
          %1583 = sbr.rel (%p1581) target = $region92
        $region91: #{tpu_custom_call.1} parent=87 // pred_region
          %s1584 = sand.u32 %s230, 1
          %s1585 = scalar_lea.sflag [#allocation4], %s1584
          %s1586 = sand.u32 %s230, 1
          %s1587 = scalar_lea.vmem [#allocation13], %s1586
          %1588 = dma.done %s1585, 16
        $region92: #{tpu_custom_call.1} parent=87 // pred_fallthru
          _
      $region88: #{tpu_custom_call.1} parent=5 // pred_fallthru
        _
    $region6: #{tpu_custom_call.1} parent=1 // loop_footer
      %s26 = sadd.s32 1, %s22
    $region7: #{tpu_custom_call.1} parent=1 // loop_footer_branch
      %21 = sbr.rel target = $region3
    $region8: #{tpu_custom_call.1} parent=1 // loop_exit
      _
    %1589 = vsyncpa [#allocation3], 1
    %s1590 = scalar_lea.sflag [#allocation3], 1
    %1591 = vsyncpa %s1590, 1
    %1592 = vsyncpa [#allocation6], 1
    %1593 = vsyncpa [#allocation9], 1
    %1594 = vsyncpa [#allocation12], 1
    %1595 = vsyncpa [#allocation4], 1
    %s1596 = scalar_lea.sflag [#allocation4], 1
    %1597 = vsyncpa %s1596, 1

</llo_original>
